<compile_context>
chip_gen: v6e
topology: v6e:2x2x1
jax: 0.10.0
libtpu: 0.0.40
codegen_flags: <defaults>
</compile_context>

<pallas_src>
import functools
import math

import jax
import jax.numpy as jnp
from jax import lax
from jax.experimental import pallas as pl
from jax.experimental.pallas import tpu as pltpu


# ---------------------------------------------------------------------------
# Tiling helper
# ---------------------------------------------------------------------------

def _pick_tile(dim, target, align):
    """Largest tile t <= target with dim % t == 0 and t % align == 0, else full dim."""
    if dim <= target:
        return dim
    t = (target // align) * align
    while t >= align:
        if dim % t == 0:
            return t
        t -= align
    return dim


# ---------------------------------------------------------------------------
# Tiled linear (bias + optional ReLU fused into the finalize)
# ---------------------------------------------------------------------------

def _matmul_kernel(x_ref, w_ref, b_ref, o_ref, acc_ref, *, activation):
    k = pl.program_id(2)

    @pl.when(k == 0)
    def _():
        acc_ref[...] = jnp.zeros_like(acc_ref)

    # x: (tm, tk), w: (tn, tk)  (PyTorch nn.Linear layout); contract on last dims,
    # no explicit transpose -> MXU consumes rhs transposed for free.
    acc_ref[...] += lax.dot_general(
        x_ref[...], w_ref[...],
        dimension_numbers=(((1,), (1,)), ((), ())),
        preferred_element_type=jnp.float32)

    @pl.when(k == pl.num_programs(2) - 1)
    def _():
        o = acc_ref[...] + b_ref[...].astype(jnp.float32)
        if activation == "relu":
            o = jnp.maximum(o, 0.0)
        o_ref[...] = o.astype(o_ref.dtype)


def _linear(x, w, b, activation=None):
    """y = activation(x @ w.T + b); x: (M, K), w: (N, K), b: (N,)."""
    M, K = x.shape
    N = w.shape[0]
    tm = _pick_tile(M, 256, 8)
    tn = _pick_tile(N, 256, 128)
    tk = _pick_tile(K, 512, 128)
    grid = (M // tm, N // tn, K // tk)
    kernel = functools.partial(_matmul_kernel, activation=activation)
    return pl.pallas_call(
        kernel,
        out_shape=jax.ShapeDtypeStruct((M, N), x.dtype),
        grid_spec=pltpu.PrefetchScalarGridSpec(
            num_scalar_prefetch=0,
            grid=grid,
            in_specs=[
                pl.BlockSpec((tm, tk), lambda i, j, k: (i, k)),
                pl.BlockSpec((tn, tk), lambda i, j, k: (j, k)),
                pl.BlockSpec((1, tn), lambda i, j, k: (0, j)),
            ],
            out_specs=pl.BlockSpec((tm, tn), lambda i, j, k: (i, j)),
            scratch_shapes=[pltpu.VMEM((tm, tn), jnp.float32)],
        ),
        compiler_params=pltpu.CompilerParams(
            dimension_semantics=("parallel", "parallel", "arbitrary")),
    )(x, w, b.reshape(1, N))


# ---------------------------------------------------------------------------
# Flash attention (online softmax, all heads of one batch per grid step)
# ---------------------------------------------------------------------------

def _flash_attn_kernel(q_ref, k_ref, v_ref, *rest, scale, causal, has_bias):
    if has_bias:
        kb_ref, o_ref, m_ref, l_ref, acc_ref = rest
    else:
        o_ref, m_ref, l_ref, acc_ref = rest

    qi = pl.program_id(1)
    ki = pl.program_id(2)
    tq = q_ref.shape[1]
    tk = k_ref.shape[1]

    @pl.when(ki == 0)
    def _():
        m_ref[...] = jnp.full_like(m_ref, -jnp.inf)
        l_ref[...] = jnp.zeros_like(l_ref)
        acc_ref[...] = jnp.zeros_like(acc_ref)

    def compute():
        q = q_ref[...]                      # (H, tq, D) native dtype
        k = k_ref[...]                      # (H, tk, D)
        s = lax.dot_general(
            q, k,
            dimension_numbers=(((2,), (2,)), ((0,), (0,))),
            preferred_element_type=jnp.float32) * scale       # (H, tq, tk) f32
        if has_bias:
            s = s + kb_ref[...].astype(jnp.float32)           # (1, 1, tk) broadcast
        if causal:
            row = qi * tq + lax.broadcasted_iota(jnp.int32, s.shape, 1)
            col = ki * tk + lax.broadcasted_iota(jnp.int32, s.shape, 2)
            s = jnp.where(col > row, jnp.float32(-1e30), s)

        m_prev = m_ref[...]
        m_new = jnp.maximum(m_prev, jnp.max(s, axis=-1, keepdims=True))
        alpha = jnp.exp(m_prev - m_new)
        p = jnp.exp(s - m_new)
        l_ref[...] = alpha * l_ref[...] + jnp.sum(p, axis=-1, keepdims=True)
        pv = lax.dot_general(
            p.astype(v_ref.dtype), v_ref[...],
            dimension_numbers=(((2,), (1,)), ((0,), (0,))),
            preferred_element_type=jnp.float32)               # (H, tq, D)
        acc_ref[...] = alpha * acc_ref[...] + pv
        m_ref[...] = m_new

    if causal:
        # Skip KV tiles that lie entirely above the causal diagonal.
        @pl.when(ki * tk < (qi + 1) * tq)
        def _():
            compute()
    else:
        compute()

    @pl.when(ki == pl.num_programs(2) - 1)
    def _():
        inv = pl.reciprocal(l_ref[...], approx=True)
        o_ref[...] = (acc_ref[...] * inv).astype(o_ref.dtype)


def _flash_attention(q, k, v, key_bias, *, num_heads, scale, causal):
    """q/k/v: (B*H, L/S, D); key_bias: (B, 1, S) additive f32 bias or None."""
    BH, L, D = q.shape
    S = k.shape[1]
    H = num_heads
    B = BH // H
    tq = _pick_tile(L, 256, 8)
    tk = _pick_tile(S, 256, 128)
    grid = (B, L // tq, S // tk)
    has_bias = key_bias is not None
    kernel = functools.partial(_flash_attn_kernel, scale=scale, causal=causal,
                               has_bias=has_bias)

    in_specs = [
        pl.BlockSpec((H, tq, D), lambda b, qi, ki: (b, qi, 0)),
        pl.BlockSpec((H, tk, D), lambda b, qi, ki: (b, ki, 0)),
        pl.BlockSpec((H, tk, D), lambda b, qi, ki: (b, ki, 0)),
    ]
    args = [q, k, v]
    if has_bias:
        in_specs.append(pl.BlockSpec((1, 1, tk), lambda b, qi, ki: (b, 0, ki)))
        args.append(key_bias)

    return pl.pallas_call(
        kernel,
        out_shape=jax.ShapeDtypeStruct((BH, L, D), q.dtype),
        grid_spec=pltpu.PrefetchScalarGridSpec(
            num_scalar_prefetch=0,
            grid=grid,
            in_specs=in_specs,
            out_specs=pl.BlockSpec((H, tq, D), lambda b, qi, ki: (b, qi, 0)),
            scratch_shapes=[
                pltpu.VMEM((H, tq, 1), jnp.float32),   # running max m
                pltpu.VMEM((H, tq, 1), jnp.float32),   # running denom l
                pltpu.VMEM((H, tq, D), jnp.float32),   # output accumulator
            ],
        ),
        compiler_params=pltpu.CompilerParams(
            dimension_semantics=("parallel", "parallel", "arbitrary")),
    )(*args)


# ---------------------------------------------------------------------------
# Fused residual-add + LayerNorm
# ---------------------------------------------------------------------------

def _add_ln_kernel(x_ref, y_ref, g_ref, b_ref, o_ref, *, eps):
    x = x_ref[...].astype(jnp.float32) + y_ref[...].astype(jnp.float32)
    mu = jnp.mean(x, axis=-1, keepdims=True)
    xc = x - mu
    var = jnp.mean(xc * xc, axis=-1, keepdims=True)
    inv = lax.rsqrt(var + eps)
    o = xc * inv * g_ref[...].astype(jnp.float32) + b_ref[...].astype(jnp.float32)
    o_ref[...] = o.astype(o_ref.dtype)


def _add_layernorm(x, y, gamma, beta, eps=1e-5):
    """LayerNorm(x + y) over the last dim; x, y: (B, L, E)."""
    B, L, E = x.shape
    M = B * L
    tm = _pick_tile(M, 512, 8)
    kernel = functools.partial(_add_ln_kernel, eps=eps)
    out = pl.pallas_call(
        kernel,
        out_shape=jax.ShapeDtypeStruct((M, E), x.dtype),
        grid_spec=pltpu.PrefetchScalarGridSpec(
            num_scalar_prefetch=0,
            grid=(M // tm,),
            in_specs=[
                pl.BlockSpec((tm, E), lambda i: (i, 0)),
                pl.BlockSpec((tm, E), lambda i: (i, 0)),
                pl.BlockSpec((1, E), lambda i: (0, 0)),
                pl.BlockSpec((1, E), lambda i: (0, 0)),
            ],
            out_specs=pl.BlockSpec((tm, E), lambda i: (i, 0)),
        ),
        compiler_params=pltpu.CompilerParams(dimension_semantics=("parallel",)),
    )(x.reshape(M, E), y.reshape(M, E), gamma.reshape(1, E), beta.reshape(1, E))
    return out.reshape(B, L, E)


# ---------------------------------------------------------------------------
# AttentionBlock / TransformerBlock forwards
# ---------------------------------------------------------------------------

def attention_block_forward(x_in, kv_in, params, *, num_heads, masking,
                            key_mask=None, self_attn=True):
    """nn.MultiheadAttention(batch_first=True) forward, eval mode."""
    B, L, E = x_in.shape
    S = kv_in.shape[1]
    H = num_heads
    D = E // H
    scale = 1.0 / math.sqrt(D)
    w_in, b_in, w_out, b_out = params          # (3E,E), (3E,), (E,E), (E,)

    if self_attn:
        # Fused QKV projection: one matmul, one read of the activation.
        qkv = _linear(x_in.reshape(B * L, E), w_in, b_in)             # (B*L, 3E)
        qkv = qkv.reshape(B, L, 3, H, D).transpose(2, 0, 3, 1, 4)     # (3, B, H, L, D)
        qh = qkv[0].reshape(B * H, L, D)
        kh = qkv[1].reshape(B * H, S, D)
        vh = qkv[2].reshape(B * H, S, D)
    else:
        q = _linear(x_in.reshape(B * L, E), w_in[:E], b_in[:E])       # (B*L, E)
        kv = _linear(kv_in.reshape(B * S, E), w_in[E:], b_in[E:])     # fused KV (B*S, 2E)
        qh = q.reshape(B, L, H, D).transpose(0, 2, 1, 3).reshape(B * H, L, D)
        kv = kv.reshape(B, S, 2, H, D).transpose(2, 0, 3, 1, 4)       # (2, B, H, S, D)
        kh = kv[0].reshape(B * H, S, D)
        vh = kv[1].reshape(B * H, S, D)

    if key_mask is None:
        kbias = None                                                  # no-bias kernel variant
    else:
        kbias = jnp.where(key_mask, jnp.float32(-1e30),
                          jnp.float32(0.0)).reshape(B, 1, S)

    attn = _flash_attention(qh, kh, vh, kbias, num_heads=H,
                            scale=scale, causal=masking)              # (B*H, L, D)

    attn = attn.reshape(B, H, L, D).transpose(0, 2, 1, 3).reshape(B * L, E)
    out = _linear(attn, w_out, b_out)
    return out.reshape(B, L, E)


def transformer_block_forward(x, params, *, num_heads, decoder=False, masking=True,
                              input_key_mask=None, cross_key_mask=None, kv_cross=None):
    """TransformerBlock.forward (eval mode)."""
    B, L, E = x.shape

    a1 = attention_block_forward(x, x, params["attn1"], num_heads=num_heads,
                                 masking=masking, key_mask=input_key_mask,
                                 self_attn=True)
    x = _add_layernorm(x, a1, *params["ln1"])

    if decoder:
        a2 = attention_block_forward(x, kv_cross, params["attn2"], num_heads=num_heads,
                                     masking=False, key_mask=cross_key_mask,
                                     self_attn=False)
        x = _add_layernorm(x, a2, *params["ln2"])

    w1, b1, w2, b2 = params["mlp"]
    h = _linear(x.reshape(B * L, E), w1, b1, activation="relu")       # (B*L, 4E)
    m = _linear(h, w2, b2).reshape(B, L, E)                           # (B*L, E)
    return _add_layernorm(x, m, *params["ln_mlp"])


# ---------------------------------------------------------------------------
# Pure-JAX reference for verification
# ---------------------------------------------------------------------------

def _ref_attention(x_in, kv_in, p, *, num_heads, masking, key_mask):
    B, L, E = x_in.shape
    S = kv_in.shape[1]
    H = num_heads
    D = E // H
    w_in, b_in, w_out, b_out = p
    q = x_in @ w_in[:E].T + b_in[:E]
    k = kv_in @ w_in[E:2 * E].T + b_in[E:2 * E]
    v = kv_in @ w_in[2 * E:].T + b_in[2 * E:]
    q = q.reshape(B, L, H, D).transpose(0, 2, 1, 3)
    k = k.reshape(B, S, H, D).transpose(0, 2, 1, 3)
    v = v.reshape(B, S, H, D).transpose(0, 2, 1, 3)
    s = jnp.einsum("bhld,bhsd->bhls", q, k) / math.sqrt(D)
    if key_mask is not None:
        s = s + jnp.where(key_mask, -1e30, 0.0)[:, None, None, :]
    if masking:
        row = jnp.arange(L)[:, None]
        col = jnp.arange(S)[None, :]
        s = jnp.where(col > row, -1e30, s)
    w = jax.nn.softmax(s, axis=-1)
    o = jnp.einsum("bhls,bhsd->bhld", w, v)
    o = o.transpose(0, 2, 1, 3).reshape(B, L, E)
    return o @ w_out.T + b_out


def _ref_layernorm(x, g, b, eps=1e-5):
    mu = x.mean(-1, keepdims=True)
    var = ((x - mu) ** 2).mean(-1, keepdims=True)
    return (x - mu) / jnp.sqrt(var + eps) * g + b


def _ref_transformer_block(x, params, *, num_heads, decoder=False, masking=True,
                           input_key_mask=None, cross_key_mask=None, kv_cross=None):
    a1 = _ref_attention(x, x, params["attn1"], num_heads=num_heads,
                        masking=masking, key_mask=input_key_mask)
    x = _ref_layernorm(x + a1, *params["ln1"])
    if decoder:
        a2 = _ref_attention(x, kv_cross, params["attn2"], num_heads=num_heads,
                            masking=False, key_mask=cross_key_mask)
        x = _ref_layernorm(x + a2, *params["ln2"])
    w1, b1, w2, b2 = params["mlp"]
    h = jnp.maximum(x @ w1.T + b1, 0.0)
    m = h @ w2.T + b2
    return _ref_layernorm(x + m, *params["ln_mlp"])


# ---------------------------------------------------------------------------

def _init_params(key, E, decoder):
    ks = iter(jax.random.split(key, 32))

    def nrm(shape, scale=0.05):
        return scale * jax.random.normal(next(ks), shape, dtype=jnp.float32)

    def attn_params():
        return (nrm((3 * E, E)), nrm((3 * E,)), nrm((E, E)), nrm((E,)))

    def ln_params():
        return (1.0 + 0.1 * jax.random.normal(next(ks), (E,), dtype=jnp.float32),
                0.05 * jax.random.normal(next(ks), (E,), dtype=jnp.float32))

    params = {
        "attn1": attn_params(),
        "ln1": ln_params(),
        "mlp": (nrm((4 * E, E)), nrm((4 * E,)), nrm((E, 4 * E)), nrm((E,))),
        "ln_mlp": ln_params(),
    }
    if decoder:
        params["attn2"] = attn_params()
        params["ln2"] = ln_params()
    return params


if __name__ == "__main__":
    # Small shapes consistent with the module (hidden divisible by num_heads).
    B, L, E, H = 2, 8, 32, 4
    key = jax.random.PRNGKey(0)
    k_x, k_kv, k_p = jax.random.split(key, 3)

    x = jax.random.normal(k_x, (B, L, E), dtype=jnp.float32)
    kv_cross = jax.random.normal(k_kv, (B, L, E), dtype=jnp.float32)
    params = _init_params(k_p, E, decoder=True)

    # Key-padding masks (True = ignore); pad only trailing keys so no row is fully masked.
    input_key_mask = jnp.zeros((B, L), dtype=bool).at[0, -1].set(True)
    cross_key_mask = jnp.zeros((B, L), dtype=bool).at[:, -2:].set(True)

    # --- Encoder-style block (decoder=False, causal self-attention) ---------
    fwd_enc = jax.jit(functools.partial(transformer_block_forward,
                                        num_heads=H, decoder=False, masking=True))
    out_enc = jax.block_until_ready(fwd_enc(x, params))
    ref_enc = _ref_transformer_block(x, params, num_heads=H, decoder=False, masking=True)
    assert out_enc.shape == (B, L, E)
    assert jnp.allclose(out_enc, ref_enc, atol=2e-3, rtol=2e-3), "encoder mismatch vs reference"

    # --- Decoder-style block (cross-attention + key padding masks) ----------
    fwd_dec = jax.jit(functools.partial(transformer_block_forward,
                                        num_heads=H, decoder=True, masking=True))
    out_dec = jax.block_until_ready(
        fwd_dec(x, params, input_key_mask=input_key_mask,
                cross_key_mask=cross_key_mask, kv_cross=kv_cross))
    ref_dec = _ref_transformer_block(x, params, num_heads=H, decoder=True, masking=True,
                                     input_key_mask=input_key_mask,
                                     cross_key_mask=cross_key_mask, kv_cross=kv_cross)
    assert out_dec.shape == (B, L, E)
    assert jnp.allclose(out_dec, ref_dec, atol=2e-3, rtol=2e-3), "decoder mismatch vs reference"

    print("KERNEL_OK")
</pallas_src>

<mosaic_0001>
module attributes {stable_mosaic.version = 11 : i64} {
  func.func @_matmul_kernel(%arg0: i32, %arg1: i32, %arg2: i32, %arg3: memref<16x32xf32, #tpu.memory_space<vmem>>, %arg4: memref<96x32xf32, #tpu.memory_space<vmem>>, %arg5: memref<1x96xf32, #tpu.memory_space<vmem>>, %arg6: memref<16x96xf32, #tpu.memory_space<vmem>>, %arg7: memref<16x96xf32, #tpu.memory_space<vmem>>) attributes {dimension_semantics = [#tpu.dimension_semantics<parallel>, #tpu.dimension_semantics<parallel>, #tpu.dimension_semantics<arbitrary>], iteration_bounds = array<i64: 1, 1, 1>, scalar_prefetch = 0 : i64, scratch_operands = 1 : i64, tpu.core_type = #tpu.core_type<tc>, window_params = [{transform_indices = @transform_0, window_bounds = array<i64: 16, 32>}, {transform_indices = @transform_1, window_bounds = array<i64: 96, 32>}, {transform_indices = @transform_2, window_bounds = array<i64: 1, 96>}, {transform_indices = @transform_3, window_bounds = array<i64: 16, 96>}]} {
    %c0_i32 = arith.constant 0 : i32
    %0 = arith.cmpi eq, %arg2, %c0_i32 : i32
    %1 = arith.extui %0 : i1 to i32
    %c0_i32_0 = arith.constant 0 : i32
    %2 = arith.cmpi ne, %1, %c0_i32_0 : i32
    scf.if %2 {
      %cst_10 = arith.constant 0.000000e+00 : f32
      %12 = vector.broadcast %cst_10 : f32 to vector<16x96xf32>
      %c0_11 = arith.constant 0 : index
      %c0_12 = arith.constant 0 : index
      %13 = vector.load %arg7[%c0_11, %c0_12] : memref<16x96xf32, #tpu.memory_space<vmem>>, vector<16x96xf32>
      tpu.vector_store %arg7[%c0_11, %c0_12], %12 {strides = array<i32>} : memref<16x96xf32, #tpu.memory_space<vmem>>, vector<16x96xf32>,
    } else {
    }
    %c0 = arith.constant 0 : index
    %c0_1 = arith.constant 0 : index
    %3 = vector.load %arg7[%c0, %c0_1] : memref<16x96xf32, #tpu.memory_space<vmem>>, vector<16x96xf32>
    %c0_2 = arith.constant 0 : index
    %c0_3 = arith.constant 0 : index
    %4 = vector.load %arg3[%c0_2, %c0_3] : memref<16x32xf32, #tpu.memory_space<vmem>>, vector<16x32xf32>
    %c0_4 = arith.constant 0 : index
    %c0_5 = arith.constant 0 : index
    %5 = vector.load %arg4[%c0_4, %c0_5] : memref<96x32xf32, #tpu.memory_space<vmem>>, vector<96x32xf32>
    %cst = arith.constant dense<0.000000e+00> : vector<16x96xf32>
    %6 = tpu.matmul %4, %5, %cst {dimension_numbers = #tpu.dot_dimension_numbers<[1], [1], [0], [0], [0, 0, 1, 0], [], []>} : vector<16x32xf32>, vector<96x32xf32>, vector<16x96xf32> -> vector<16x96xf32>
    %7 = arith.addf %3, %6 : vector<16x96xf32>
    %c0_6 = arith.constant 0 : index
    %c0_7 = arith.constant 0 : index
    %8 = vector.load %arg7[%c0_6, %c0_7] : memref<16x96xf32, #tpu.memory_space<vmem>>, vector<16x96xf32>
    tpu.vector_store %arg7[%c0_6, %c0_7], %7 {strides = array<i32>} : memref<16x96xf32, #tpu.memory_space<vmem>>, vector<16x96xf32>,
    %c0_i32_8 = arith.constant 0 : i32
    %9 = arith.cmpi eq, %arg2, %c0_i32_8 : i32
    %10 = arith.extui %9 : i1 to i32
    %c0_i32_9 = arith.constant 0 : i32
    %11 = arith.cmpi ne, %10, %c0_i32_9 : i32
    scf.if %11 {
      %c0_10 = arith.constant 0 : index
      %c0_11 = arith.constant 0 : index
      %12 = vector.load %arg7[%c0_10, %c0_11] : memref<16x96xf32, #tpu.memory_space<vmem>>, vector<16x96xf32>
      %c0_12 = arith.constant 0 : index
      %c0_13 = arith.constant 0 : index
      %13 = vector.load %arg5[%c0_12, %c0_13] : memref<1x96xf32, #tpu.memory_space<vmem>>, vector<1x96xf32>
      %14 = vector.broadcast %13 : vector<1x96xf32> to vector<16x96xf32>
      %15 = arith.addf %12, %14 : vector<16x96xf32>
      %c0_14 = arith.constant 0 : index
      %c0_15 = arith.constant 0 : index
      %16 = vector.load %arg6[%c0_14, %c0_15] : memref<16x96xf32, #tpu.memory_space<vmem>>, vector<16x96xf32>
      tpu.vector_store %arg6[%c0_14, %c0_15], %15 {strides = array<i32>} : memref<16x96xf32, #tpu.memory_space<vmem>>, vector<16x96xf32>,
    } else {
    }
    return
  }
  func.func @transform_0(%arg0: i32, %arg1: i32, %arg2: i32) -> (i32, i32) {
    %c0_i32 = arith.constant 0 : i32
    return %arg0, %arg2 : i32, i32
  }
  func.func @transform_1(%arg0: i32, %arg1: i32, %arg2: i32) -> (i32, i32) {
    %c0_i32 = arith.constant 0 : i32
    return %arg1, %arg2 : i32, i32
  }
  func.func @transform_2(%arg0: i32, %arg1: i32, %arg2: i32) -> (i32, i32) {
    %c0_i32 = arith.constant 0 : i32
    %c0_i32_0 = arith.constant 0 : i32
    return %c0_i32, %arg1 : i32, i32
  }
  func.func @transform_3(%arg0: i32, %arg1: i32, %arg2: i32) -> (i32, i32) {
    %c0_i32 = arith.constant 0 : i32
    return %arg0, %arg1 : i32, i32
  }
}

module attributes {stable_mosaic.version = 11 : i64} {
  func.func @_flash_attn_kernel(%arg0: i32, %arg1: i32, %arg2: i32, %arg3: memref<4x8x8xf32, #tpu.memory_space<vmem>>, %arg4: memref<4x8x8xf32, #tpu.memory_space<vmem>>, %arg5: memref<4x8x8xf32, #tpu.memory_space<vmem>>, %arg6: memref<4x8x8xf32, #tpu.memory_space<vmem>>, %arg7: memref<4x8x1xf32, #tpu.memory_space<vmem>>, %arg8: memref<4x8x1xf32, #tpu.memory_space<vmem>>, %arg9: memref<4x8x8xf32, #tpu.memory_space<vmem>>) attributes {dimension_semantics = [#tpu.dimension_semantics<parallel>, #tpu.dimension_semantics<parallel>, #tpu.dimension_semantics<arbitrary>], iteration_bounds = array<i64: 2, 1, 1>, scalar_prefetch = 0 : i64, scratch_operands = 3 : i64, tpu.core_type = #tpu.core_type<tc>, window_params = [{transform_indices = @transform_0, window_bounds = array<i64: 4, 8, 8>}, {transform_indices = @transform_1, window_bounds = array<i64: 4, 8, 8>}, {transform_indices = @transform_2, window_bounds = array<i64: 4, 8, 8>}, {transform_indices = @transform_3, window_bounds = array<i64: 4, 8, 8>}]} {
    %c0_i32 = arith.constant 0 : i32
    %0 = arith.cmpi eq, %arg2, %c0_i32 : i32
    %1 = arith.extui %0 : i1 to i32
    %c0_i32_0 = arith.constant 0 : i32
    %2 = arith.cmpi ne, %1, %c0_i32_0 : i32
    scf.if %2 {
      %cst = arith.constant 0xFF800000 : f32
      %12 = vector.broadcast %cst : f32 to vector<4x8x1xf32>
      %c0 = arith.constant 0 : index
      %c0_5 = arith.constant 0 : index
      %c0_6 = arith.constant 0 : index
      %13 = vector.load %arg7[%c0, %c0_5, %c0_6] : memref<4x8x1xf32, #tpu.memory_space<vmem>>, vector<4x8x1xf32>
      tpu.vector_store %arg7[%c0, %c0_5, %c0_6], %12 {strides = array<i32>} : memref<4x8x1xf32, #tpu.memory_space<vmem>>, vector<4x8x1xf32>,
      %cst_7 = arith.constant 0.000000e+00 : f32
      %14 = vector.broadcast %cst_7 : f32 to vector<4x8x1xf32>
      %c0_8 = arith.constant 0 : index
      %c0_9 = arith.constant 0 : index
      %c0_10 = arith.constant 0 : index
      %15 = vector.load %arg8[%c0_8, %c0_9, %c0_10] : memref<4x8x1xf32, #tpu.memory_space<vmem>>, vector<4x8x1xf32>
      tpu.vector_store %arg8[%c0_8, %c0_9, %c0_10], %14 {strides = array<i32>} : memref<4x8x1xf32, #tpu.memory_space<vmem>>, vector<4x8x1xf32>,
      %cst_11 = arith.constant 0.000000e+00 : f32
      %16 = vector.broadcast %cst_11 : f32 to vector<4x8x8xf32>
      %c0_12 = arith.constant 0 : index
      %c0_13 = arith.constant 0 : index
      %c0_14 = arith.constant 0 : index
      %17 = vector.load %arg9[%c0_12, %c0_13, %c0_14] : memref<4x8x8xf32, #tpu.memory_space<vmem>>, vector<4x8x8xf32>
      tpu.vector_store %arg9[%c0_12, %c0_13, %c0_14], %16 {strides = array<i32>} : memref<4x8x8xf32, #tpu.memory_space<vmem>>, vector<4x8x8xf32>,
    } else {
    }
    %c8_i32 = arith.constant 8 : i32
    %3 = arith.muli %arg2, %c8_i32 : i32
    %c1_i32 = arith.constant 1 : i32
    %4 = arith.addi %arg1, %c1_i32 : i32
    %c8_i32_1 = arith.constant 8 : i32
    %5 = arith.muli %4, %c8_i32_1 : i32
    %6 = arith.cmpi slt, %3, %5 : i32
    %7 = arith.extui %6 : i1 to i32
    %c0_i32_2 = arith.constant 0 : i32
    %8 = arith.cmpi ne, %7, %c0_i32_2 : i32
    scf.if %8 {
      %c0 = arith.constant 0 : index
      %c0_5 = arith.constant 0 : index
      %c0_6 = arith.constant 0 : index
      %12 = vector.load %arg3[%c0, %c0_5, %c0_6] : memref<4x8x8xf32, #tpu.memory_space<vmem>>, vector<4x8x8xf32>
      %c0_7 = arith.constant 0 : index
      %c0_8 = arith.constant 0 : index
      %c0_9 = arith.constant 0 : index
      %13 = vector.load %arg4[%c0_7, %c0_8, %c0_9] : memref<4x8x8xf32, #tpu.memory_space<vmem>>, vector<4x8x8xf32>
      %cst = arith.constant dense<0.000000e+00> : vector<4x8x8xf32>
      %14 = tpu.matmul %12, %13, %cst {dimension_numbers = #tpu.dot_dimension_numbers<[2], [2], [1], [1], [0, 0, 0, 1, 1, 1], [0], [0]>} : vector<4x8x8xf32>, vector<4x8x8xf32>, vector<4x8x8xf32> -> vector<4x8x8xf32>
      %cst_10 = arith.constant 0.353553385 : f32
      %15 = vector.broadcast %cst_10 : f32 to vector<4x8x8xf32>
      %16 = arith.mulf %14, %15 : vector<4x8x8xf32>
      %c8_i32_11 = arith.constant 8 : i32
      %17 = arith.muli %arg1, %c8_i32_11 : i32
      %18 = tpu.iota {dimensions = array<i32: 1>} : vector<4x8x8xi32>
      %19 = vector.broadcast %17 : i32 to vector<4x8x8xi32>
      %20 = arith.addi %19, %18 : vector<4x8x8xi32>
      %c8_i32_12 = arith.constant 8 : i32
      %21 = arith.muli %arg2, %c8_i32_12 : i32
      %22 = tpu.iota {dimensions = array<i32: 2>} : vector<4x8x8xi32>
      %23 = vector.broadcast %21 : i32 to vector<4x8x8xi32>
      %24 = arith.addi %23, %22 : vector<4x8x8xi32>
      %25 = arith.cmpi sgt, %24, %20 : vector<4x8x8xi32>
      %cst_13 = arith.constant -1.000000e+30 : f32
      %26 = vector.broadcast %cst_13 : f32 to vector<4x8x8xf32>
      %27 = arith.select %25, %26, %16 : vector<4x8x8xi1>, vector<4x8x8xf32>
      %c0_14 = arith.constant 0 : index
      %c0_15 = arith.constant 0 : index
      %c0_16 = arith.constant 0 : index
      %28 = vector.load %arg7[%c0_14, %c0_15, %c0_16] : memref<4x8x1xf32, #tpu.memory_space<vmem>>, vector<4x8x1xf32>
      %cst_17 = arith.constant dense<0xFF800000> : vector<4x8xf32>
      %29 = vector.multi_reduction <maximumf>, %27, %cst_17 [2] : vector<4x8x8xf32> to vector<4x8xf32>
      %30 = vector.shape_cast %29 : vector<4x8xf32> to vector<4x8x1xf32>
      %31 = arith.maximumf %28, %30 : vector<4x8x1xf32>
      %32 = arith.subf %28, %31 : vector<4x8x1xf32>
      %33 = math.exp %32 : vector<4x8x1xf32>
      %34 = vector.broadcast %31 : vector<4x8x1xf32> to vector<4x8x8xf32>
      %35 = arith.subf %27, %34 : vector<4x8x8xf32>
      %36 = math.exp %35 : vector<4x8x8xf32>
      %c0_18 = arith.constant 0 : index
      %c0_19 = arith.constant 0 : index
      %c0_20 = arith.constant 0 : index
      %37 = vector.load %arg8[%c0_18, %c0_19, %c0_20] : memref<4x8x1xf32, #tpu.memory_space<vmem>>, vector<4x8x1xf32>
      %38 = arith.mulf %33, %37 : vector<4x8x1xf32>
      %cst_21 = arith.constant dense<0.000000e+00> : vector<4x8xf32>
      %39 = vector.multi_reduction <add>, %36, %cst_21 [2] : vector<4x8x8xf32> to vector<4x8xf32>
      %40 = vector.shape_cast %39 : vector<4x8xf32> to vector<4x8x1xf32>
      %41 = arith.addf %38, %40 : vector<4x8x1xf32>
      %c0_22 = arith.constant 0 : index
      %c0_23 = arith.constant 0 : index
      %c0_24 = arith.constant 0 : index
      %42 = vector.load %arg8[%c0_22, %c0_23, %c0_24] : memref<4x8x1xf32, #tpu.memory_space<vmem>>, vector<4x8x1xf32>
      tpu.vector_store %arg8[%c0_22, %c0_23, %c0_24], %41 {strides = array<i32>} : memref<4x8x1xf32, #tpu.memory_space<vmem>>, vector<4x8x1xf32>,
      %c0_25 = arith.constant 0 : index
      %c0_26 = arith.constant 0 : index
      %c0_27 = arith.constant 0 : index
      %43 = vector.load %arg5[%c0_25, %c0_26, %c0_27] : memref<4x8x8xf32, #tpu.memory_space<vmem>>, vector<4x8x8xf32>
      %cst_28 = arith.constant dense<0.000000e+00> : vector<4x8x8xf32>
      %44 = tpu.matmul %36, %43, %cst_28 {dimension_numbers = #tpu.dot_dimension_numbers<[2], [1], [1], [2], [0, 0, 0, 1, 1, 2], [0], [0]>} : vector<4x8x8xf32>, vector<4x8x8xf32>, vector<4x8x8xf32> -> vector<4x8x8xf32>
      %c0_29 = arith.constant 0 : index
      %c0_30 = arith.constant 0 : index
      %c0_31 = arith.constant 0 : index
      %45 = vector.load %arg9[%c0_29, %c0_30, %c0_31] : memref<4x8x8xf32, #tpu.memory_space<vmem>>, vector<4x8x8xf32>
      %46 = vector.broadcast %33 : vector<4x8x1xf32> to vector<4x8x8xf32>
      %47 = arith.mulf %46, %45 : vector<4x8x8xf32>
      %48 = arith.addf %47, %44 : vector<4x8x8xf32>
      %c0_32 = arith.constant 0 : index
      %c0_33 = arith.constant 0 : index
      %c0_34 = arith.constant 0 : index
      %49 = vector.load %arg9[%c0_32, %c0_33, %c0_34] : memref<4x8x8xf32, #tpu.memory_space<vmem>>, vector<4x8x8xf32>
      tpu.vector_store %arg9[%c0_32, %c0_33, %c0_34], %48 {strides = array<i32>} : memref<4x8x8xf32, #tpu.memory_space<vmem>>, vector<4x8x8xf32>,
      %c0_35 = arith.constant 0 : index
      %c0_36 = arith.constant 0 : index
      %c0_37 = arith.constant 0 : index
      %50 = vector.load %arg7[%c0_35, %c0_36, %c0_37] : memref<4x8x1xf32, #tpu.memory_space<vmem>>, vector<4x8x1xf32>
      tpu.vector_store %arg7[%c0_35, %c0_36, %c0_37], %31 {strides = array<i32>} : memref<4x8x1xf32, #tpu.memory_space<vmem>>, vector<4x8x1xf32>,
    } else {
    }
    %c0_i32_3 = arith.constant 0 : i32
    %9 = arith.cmpi eq, %arg2, %c0_i32_3 : i32
    %10 = arith.extui %9 : i1 to i32
    %c0_i32_4 = arith.constant 0 : i32
    %11 = arith.cmpi ne, %10, %c0_i32_4 : i32
    scf.if %11 {
      %c0 = arith.constant 0 : index
      %c0_5 = arith.constant 0 : index
      %c0_6 = arith.constant 0 : index
      %12 = vector.load %arg8[%c0, %c0_5, %c0_6] : memref<4x8x1xf32, #tpu.memory_space<vmem>>, vector<4x8x1xf32>
      %13 = tpu.reciprocal %12 {approx = true} : vector<4x8x1xf32> -> vector<4x8x1xf32>
      %c0_7 = arith.constant 0 : index
      %c0_8 = arith.constant 0 : index
      %c0_9 = arith.constant 0 : index
      %14 = vector.load %arg9[%c0_7, %c0_8, %c0_9] : memref<4x8x8xf32, #tpu.memory_space<vmem>>, vector<4x8x8xf32>
      %15 = vector.broadcast %13 : vector<4x8x1xf32> to vector<4x8x8xf32>
      %16 = arith.mulf %14, %15 : vector<4x8x8xf32>
      %c0_10 = arith.constant 0 : index
      %c0_11 = arith.constant 0 : index
      %c0_12 = arith.constant 0 : index
      %17 = vector.load %arg6[%c0_10, %c0_11, %c0_12] : memref<4x8x8xf32, #tpu.memory_space<vmem>>, vector<4x8x8xf32>
      tpu.vector_store %arg6[%c0_10, %c0_11, %c0_12], %16 {strides = array<i32>} : memref<4x8x8xf32, #tpu.memory_space<vmem>>, vector<4x8x8xf32>,
    } else {
    }
    return
  }
  func.func @transform_0(%arg0: i32, %arg1: i32, %arg2: i32) -> (i32, i32, i32) {
    %c0_i32 = arith.constant 0 : i32
    %c0_i32_0 = arith.constant 0 : i32
    return %arg0, %arg1, %c0_i32 : i32, i32, i32
  }
  func.func @transform_1(%arg0: i32, %arg1: i32, %arg2: i32) -> (i32, i32, i32) {
    %c0_i32 = arith.constant 0 : i32
    %c0_i32_0 = arith.constant 0 : i32
    return %arg0, %arg2, %c0_i32 : i32, i32, i32
  }
  func.func @transform_2(%arg0: i32, %arg1: i32, %arg2: i32) -> (i32, i32, i32) {
    %c0_i32 = arith.constant 0 : i32
    %c0_i32_0 = arith.constant 0 : i32
    return %arg0, %arg2, %c0_i32 : i32, i32, i32
  }
  func.func @transform_3(%arg0: i32, %arg1: i32, %arg2: i32) -> (i32, i32, i32) {
    %c0_i32 = arith.constant 0 : i32
    %c0_i32_0 = arith.constant 0 : i32
    return %arg0, %arg1, %c0_i32 : i32, i32, i32
  }
}

module attributes {stable_mosaic.version = 11 : i64} {
  func.func @_add_ln_kernel(%arg0: i32, %arg1: memref<16x32xf32, #tpu.memory_space<vmem>>, %arg2: memref<16x32xf32, #tpu.memory_space<vmem>>, %arg3: memref<1x32xf32, #tpu.memory_space<vmem>>, %arg4: memref<1x32xf32, #tpu.memory_space<vmem>>, %arg5: memref<16x32xf32, #tpu.memory_space<vmem>>) attributes {dimension_semantics = [#tpu.dimension_semantics<parallel>], iteration_bounds = array<i64: 1>, scalar_prefetch = 0 : i64, scratch_operands = 0 : i64, tpu.core_type = #tpu.core_type<tc>, window_params = [{transform_indices = @transform_0, window_bounds = array<i64: 16, 32>}, {transform_indices = @transform_1, window_bounds = array<i64: 16, 32>}, {pipeline_mode = #tpu.pipeline_mode<synchronous>, transform_indices = @transform_2, window_bounds = array<i64: 1, 32>}, {pipeline_mode = #tpu.pipeline_mode<synchronous>, transform_indices = @transform_3, window_bounds = array<i64: 1, 32>}, {transform_indices = @transform_4, window_bounds = array<i64: 16, 32>}]} {
    %c0 = arith.constant 0 : index
    %c0_0 = arith.constant 0 : index
    %0 = vector.load %arg1[%c0, %c0_0] : memref<16x32xf32, #tpu.memory_space<vmem>>, vector<16x32xf32>
    %c0_1 = arith.constant 0 : index
    %c0_2 = arith.constant 0 : index
    %1 = vector.load %arg2[%c0_1, %c0_2] : memref<16x32xf32, #tpu.memory_space<vmem>>, vector<16x32xf32>
    %2 = arith.addf %0, %1 : vector<16x32xf32>
    %cst = arith.constant dense<0.000000e+00> : vector<16xf32>
    %3 = vector.multi_reduction <add>, %2, %cst [1] : vector<16x32xf32> to vector<16xf32>
    %4 = vector.shape_cast %3 : vector<16xf32> to vector<16x1xf32>
    %cst_3 = arith.constant 3.200000e+01 : f32
    %5 = vector.broadcast %cst_3 : f32 to vector<16x1xf32>
    %6 = arith.divf %4, %5 : vector<16x1xf32>
    %7 = vector.broadcast %6 : vector<16x1xf32> to vector<16x32xf32>
    %8 = arith.subf %2, %7 : vector<16x32xf32>
    %9 = arith.mulf %8, %8 : vector<16x32xf32>
    %cst_4 = arith.constant dense<0.000000e+00> : vector<16xf32>
    %10 = vector.multi_reduction <add>, %9, %cst_4 [1] : vector<16x32xf32> to vector<16xf32>
    %11 = vector.shape_cast %10 : vector<16xf32> to vector<16x1xf32>
    %cst_5 = arith.constant 3.200000e+01 : f32
    %12 = vector.broadcast %cst_5 : f32 to vector<16x1xf32>
    %13 = arith.divf %11, %12 : vector<16x1xf32>
    %cst_6 = arith.constant 9.99999974E-6 : f32
    %14 = vector.broadcast %cst_6 : f32 to vector<16x1xf32>
    %15 = arith.addf %13, %14 : vector<16x1xf32>
    %16 = math.rsqrt %15 : vector<16x1xf32>
    %17 = vector.broadcast %16 : vector<16x1xf32> to vector<16x32xf32>
    %18 = arith.mulf %8, %17 : vector<16x32xf32>
    %c0_7 = arith.constant 0 : index
    %c0_8 = arith.constant 0 : index
    %19 = vector.load %arg3[%c0_7, %c0_8] : memref<1x32xf32, #tpu.memory_space<vmem>>, vector<1x32xf32>
    %20 = vector.broadcast %19 : vector<1x32xf32> to vector<16x32xf32>
    %21 = arith.mulf %18, %20 : vector<16x32xf32>
    %c0_9 = arith.constant 0 : index
    %c0_10 = arith.constant 0 : index
    %22 = vector.load %arg4[%c0_9, %c0_10] : memref<1x32xf32, #tpu.memory_space<vmem>>, vector<1x32xf32>
    %23 = vector.broadcast %22 : vector<1x32xf32> to vector<16x32xf32>
    %24 = arith.addf %21, %23 : vector<16x32xf32>
    %c0_11 = arith.constant 0 : index
    %c0_12 = arith.constant 0 : index
    %25 = vector.load %arg5[%c0_11, %c0_12] : memref<16x32xf32, #tpu.memory_space<vmem>>, vector<16x32xf32>
    tpu.vector_store %arg5[%c0_11, %c0_12], %24 {strides = array<i32>} : memref<16x32xf32, #tpu.memory_space<vmem>>, vector<16x32xf32>,
    return
  }
  func.func @transform_0(%arg0: i32) -> (i32, i32) {
    %c0_i32 = arith.constant 0 : i32
    %c0_i32_0 = arith.constant 0 : i32
    return %arg0, %c0_i32 : i32, i32
  }
  func.func @transform_1(%arg0: i32) -> (i32, i32) {
    %c0_i32 = arith.constant 0 : i32
    %c0_i32_0 = arith.constant 0 : i32
    return %arg0, %c0_i32 : i32, i32
  }
  func.func @transform_2(%arg0: i32) -> (i32, i32) {
    %c0_i32 = arith.constant 0 : i32
    %c0_i32_0 = arith.constant 0 : i32
    %c0_i32_1 = arith.constant 0 : i32
    return %c0_i32, %c0_i32_0 : i32, i32
  }
  func.func @transform_3(%arg0: i32) -> (i32, i32) {
    %c0_i32 = arith.constant 0 : i32
    %c0_i32_0 = arith.constant 0 : i32
    %c0_i32_1 = arith.constant 0 : i32
    return %c0_i32, %c0_i32_0 : i32, i32
  }
  func.func @transform_4(%arg0: i32) -> (i32, i32) {
    %c0_i32 = arith.constant 0 : i32
    %c0_i32_0 = arith.constant 0 : i32
    return %arg0, %c0_i32 : i32, i32
  }
}

module attributes {stable_mosaic.version = 11 : i64} {
  func.func @_matmul_kernel(%arg0: i32, %arg1: i32, %arg2: i32, %arg3: memref<16x32xf32, #tpu.memory_space<vmem>>, %arg4: memref<32x32xf32, #tpu.memory_space<vmem>>, %arg5: memref<1x32xf32, #tpu.memory_space<vmem>>, %arg6: memref<16x32xf32, #tpu.memory_space<vmem>>, %arg7: memref<16x32xf32, #tpu.memory_space<vmem>>) attributes {dimension_semantics = [#tpu.dimension_semantics<parallel>, #tpu.dimension_semantics<parallel>, #tpu.dimension_semantics<arbitrary>], iteration_bounds = array<i64: 1, 1, 1>, scalar_prefetch = 0 : i64, scratch_operands = 1 : i64, tpu.core_type = #tpu.core_type<tc>, window_params = [{transform_indices = @transform_0, window_bounds = array<i64: 16, 32>}, {transform_indices = @transform_1, window_bounds = array<i64: 32, 32>}, {transform_indices = @transform_2, window_bounds = array<i64: 1, 32>}, {transform_indices = @transform_3, window_bounds = array<i64: 16, 32>}]} {
    %c0_i32 = arith.constant 0 : i32
    %0 = arith.cmpi eq, %arg2, %c0_i32 : i32
    %1 = arith.extui %0 : i1 to i32
    %c0_i32_0 = arith.constant 0 : i32
    %2 = arith.cmpi ne, %1, %c0_i32_0 : i32
    scf.if %2 {
      %cst_10 = arith.constant 0.000000e+00 : f32
      %12 = vector.broadcast %cst_10 : f32 to vector<16x32xf32>
      %c0_11 = arith.constant 0 : index
      %c0_12 = arith.constant 0 : index
      %13 = vector.load %arg7[%c0_11, %c0_12] : memref<16x32xf32, #tpu.memory_space<vmem>>, vector<16x32xf32>
      tpu.vector_store %arg7[%c0_11, %c0_12], %12 {strides = array<i32>} : memref<16x32xf32, #tpu.memory_space<vmem>>, vector<16x32xf32>,
    } else {
    }
    %c0 = arith.constant 0 : index
    %c0_1 = arith.constant 0 : index
    %3 = vector.load %arg7[%c0, %c0_1] : memref<16x32xf32, #tpu.memory_space<vmem>>, vector<16x32xf32>
    %c0_2 = arith.constant 0 : index
    %c0_3 = arith.constant 0 : index
    %4 = vector.load %arg3[%c0_2, %c0_3] : memref<16x32xf32, #tpu.memory_space<vmem>>, vector<16x32xf32>
    %c0_4 = arith.constant 0 : index
    %c0_5 = arith.constant 0 : index
    %5 = vector.load %arg4[%c0_4, %c0_5] : memref<32x32xf32, #tpu.memory_space<vmem>>, vector<32x32xf32>
    %cst = arith.constant dense<0.000000e+00> : vector<16x32xf32>
    %6 = tpu.matmul %4, %5, %cst {dimension_numbers = #tpu.dot_dimension_numbers<[1], [1], [0], [0], [0, 0, 1, 0], [], []>} : vector<16x32xf32>, vector<32x32xf32>, vector<16x32xf32> -> vector<16x32xf32>
    %7 = arith.addf %3, %6 : vector<16x32xf32>
    %c0_6 = arith.constant 0 : index
    %c0_7 = arith.constant 0 : index
    %8 = vector.load %arg7[%c0_6, %c0_7] : memref<16x32xf32, #tpu.memory_space<vmem>>, vector<16x32xf32>
    tpu.vector_store %arg7[%c0_6, %c0_7], %7 {strides = array<i32>} : memref<16x32xf32, #tpu.memory_space<vmem>>, vector<16x32xf32>,
    %c0_i32_8 = arith.constant 0 : i32
    %9 = arith.cmpi eq, %arg2, %c0_i32_8 : i32
    %10 = arith.extui %9 : i1 to i32
    %c0_i32_9 = arith.constant 0 : i32
    %11 = arith.cmpi ne, %10, %c0_i32_9 : i32
    scf.if %11 {
      %c0_10 = arith.constant 0 : index
      %c0_11 = arith.constant 0 : index
      %12 = vector.load %arg7[%c0_10, %c0_11] : memref<16x32xf32, #tpu.memory_space<vmem>>, vector<16x32xf32>
      %c0_12 = arith.constant 0 : index
      %c0_13 = arith.constant 0 : index
      %13 = vector.load %arg5[%c0_12, %c0_13] : memref<1x32xf32, #tpu.memory_space<vmem>>, vector<1x32xf32>
      %14 = vector.broadcast %13 : vector<1x32xf32> to vector<16x32xf32>
      %15 = arith.addf %12, %14 : vector<16x32xf32>
      %c0_14 = arith.constant 0 : index
      %c0_15 = arith.constant 0 : index
      %16 = vector.load %arg6[%c0_14, %c0_15] : memref<16x32xf32, #tpu.memory_space<vmem>>, vector<16x32xf32>
      tpu.vector_store %arg6[%c0_14, %c0_15], %15 {strides = array<i32>} : memref<16x32xf32, #tpu.memory_space<vmem>>, vector<16x32xf32>,
    } else {
    }
    return
  }
  func.func @transform_0(%arg0: i32, %arg1: i32, %arg2: i32) -> (i32, i32) {
    %c0_i32 = arith.constant 0 : i32
    return %arg0, %arg2 : i32, i32
  }
  func.func @transform_1(%arg0: i32, %arg1: i32, %arg2: i32) -> (i32, i32) {
    %c0_i32 = arith.constant 0 : i32
    return %arg1, %arg2 : i32, i32
  }
  func.func @transform_2(%arg0: i32, %arg1: i32, %arg2: i32) -> (i32, i32) {
    %c0_i32 = arith.constant 0 : i32
    %c0_i32_0 = arith.constant 0 : i32
    return %c0_i32, %arg1 : i32, i32
  }
  func.func @transform_3(%arg0: i32, %arg1: i32, %arg2: i32) -> (i32, i32) {
    %c0_i32 = arith.constant 0 : i32
    return %arg0, %arg1 : i32, i32
  }
}

module attributes {stable_mosaic.version = 11 : i64} {
  func.func @_matmul_kernel(%arg0: i32, %arg1: i32, %arg2: i32, %arg3: memref<16x32xf32, #tpu.memory_space<vmem>>, %arg4: memref<128x32xf32, #tpu.memory_space<vmem>>, %arg5: memref<1x128xf32, #tpu.memory_space<vmem>>, %arg6: memref<16x128xf32, #tpu.memory_space<vmem>>, %arg7: memref<16x128xf32, #tpu.memory_space<vmem>>) attributes {dimension_semantics = [#tpu.dimension_semantics<parallel>, #tpu.dimension_semantics<parallel>, #tpu.dimension_semantics<arbitrary>], iteration_bounds = array<i64: 1, 1, 1>, scalar_prefetch = 0 : i64, scratch_operands = 1 : i64, tpu.core_type = #tpu.core_type<tc>, window_params = [{transform_indices = @transform_0, window_bounds = array<i64: 16, 32>}, {transform_indices = @transform_1, window_bounds = array<i64: 128, 32>}, {transform_indices = @transform_2, window_bounds = array<i64: 1, 128>}, {transform_indices = @transform_3, window_bounds = array<i64: 16, 128>}]} {
    %c0_i32 = arith.constant 0 : i32
    %0 = arith.cmpi eq, %arg2, %c0_i32 : i32
    %1 = arith.extui %0 : i1 to i32
    %c0_i32_0 = arith.constant 0 : i32
    %2 = arith.cmpi ne, %1, %c0_i32_0 : i32
    scf.if %2 {
      %cst_10 = arith.constant 0.000000e+00 : f32
      %12 = vector.broadcast %cst_10 : f32 to vector<16x128xf32>
      %c0_11 = arith.constant 0 : index
      %c0_12 = arith.constant 0 : index
      %13 = vector.load %arg7[%c0_11, %c0_12] : memref<16x128xf32, #tpu.memory_space<vmem>>, vector<16x128xf32>
      tpu.vector_store %arg7[%c0_11, %c0_12], %12 {strides = array<i32>} : memref<16x128xf32, #tpu.memory_space<vmem>>, vector<16x128xf32>,
    } else {
    }
    %c0 = arith.constant 0 : index
    %c0_1 = arith.constant 0 : index
    %3 = vector.load %arg7[%c0, %c0_1] : memref<16x128xf32, #tpu.memory_space<vmem>>, vector<16x128xf32>
    %c0_2 = arith.constant 0 : index
    %c0_3 = arith.constant 0 : index
    %4 = vector.load %arg3[%c0_2, %c0_3] : memref<16x32xf32, #tpu.memory_space<vmem>>, vector<16x32xf32>
    %c0_4 = arith.constant 0 : index
    %c0_5 = arith.constant 0 : index
    %5 = vector.load %arg4[%c0_4, %c0_5] : memref<128x32xf32, #tpu.memory_space<vmem>>, vector<128x32xf32>
    %cst = arith.constant dense<0.000000e+00> : vector<16x128xf32>
    %6 = tpu.matmul %4, %5, %cst {dimension_numbers = #tpu.dot_dimension_numbers<[1], [1], [0], [0], [0, 0, 1, 0], [], []>} : vector<16x32xf32>, vector<128x32xf32>, vector<16x128xf32> -> vector<16x128xf32>
    %7 = arith.addf %3, %6 : vector<16x128xf32>
    %c0_6 = arith.constant 0 : index
    %c0_7 = arith.constant 0 : index
    %8 = vector.load %arg7[%c0_6, %c0_7] : memref<16x128xf32, #tpu.memory_space<vmem>>, vector<16x128xf32>
    tpu.vector_store %arg7[%c0_6, %c0_7], %7 {strides = array<i32>} : memref<16x128xf32, #tpu.memory_space<vmem>>, vector<16x128xf32>,
    %c0_i32_8 = arith.constant 0 : i32
    %9 = arith.cmpi eq, %arg2, %c0_i32_8 : i32
    %10 = arith.extui %9 : i1 to i32
    %c0_i32_9 = arith.constant 0 : i32
    %11 = arith.cmpi ne, %10, %c0_i32_9 : i32
    scf.if %11 {
      %c0_10 = arith.constant 0 : index
      %c0_11 = arith.constant 0 : index
      %12 = vector.load %arg7[%c0_10, %c0_11] : memref<16x128xf32, #tpu.memory_space<vmem>>, vector<16x128xf32>
      %c0_12 = arith.constant 0 : index
      %c0_13 = arith.constant 0 : index
      %13 = vector.load %arg5[%c0_12, %c0_13] : memref<1x128xf32, #tpu.memory_space<vmem>>, vector<1x128xf32>
      %14 = vector.broadcast %13 : vector<1x128xf32> to vector<16x128xf32>
      %15 = arith.addf %12, %14 : vector<16x128xf32>
      %cst_14 = arith.constant 0.000000e+00 : f32
      %16 = vector.broadcast %cst_14 : f32 to vector<16x128xf32>
      %17 = arith.maximumf %15, %16 : vector<16x128xf32>
      %c0_15 = arith.constant 0 : index
      %c0_16 = arith.constant 0 : index
      %18 = vector.load %arg6[%c0_15, %c0_16] : memref<16x128xf32, #tpu.memory_space<vmem>>, vector<16x128xf32>
      tpu.vector_store %arg6[%c0_15, %c0_16], %17 {strides = array<i32>} : memref<16x128xf32, #tpu.memory_space<vmem>>, vector<16x128xf32>,
    } else {
    }
    return
  }
  func.func @transform_0(%arg0: i32, %arg1: i32, %arg2: i32) -> (i32, i32) {
    %c0_i32 = arith.constant 0 : i32
    return %arg0, %arg2 : i32, i32
  }
  func.func @transform_1(%arg0: i32, %arg1: i32, %arg2: i32) -> (i32, i32) {
    %c0_i32 = arith.constant 0 : i32
    return %arg1, %arg2 : i32, i32
  }
  func.func @transform_2(%arg0: i32, %arg1: i32, %arg2: i32) -> (i32, i32) {
    %c0_i32 = arith.constant 0 : i32
    %c0_i32_0 = arith.constant 0 : i32
    return %c0_i32, %arg1 : i32, i32
  }
  func.func @transform_3(%arg0: i32, %arg1: i32, %arg2: i32) -> (i32, i32) {
    %c0_i32 = arith.constant 0 : i32
    return %arg0, %arg1 : i32, i32
  }
}

module attributes {stable_mosaic.version = 11 : i64} {
  func.func @_add_ln_kernel(%arg0: i32, %arg1: memref<16x32xf32, #tpu.memory_space<vmem>>, %arg2: memref<16x32xf32, #tpu.memory_space<vmem>>, %arg3: memref<1x32xf32, #tpu.memory_space<vmem>>, %arg4: memref<1x32xf32, #tpu.memory_space<vmem>>, %arg5: memref<16x32xf32, #tpu.memory_space<vmem>>) attributes {dimension_semantics = [#tpu.dimension_semantics<parallel>], iteration_bounds = array<i64: 1>, scalar_prefetch = 0 : i64, scratch_operands = 0 : i64, tpu.core_type = #tpu.core_type<tc>, window_params = [{transform_indices = @transform_0, window_bounds = array<i64: 16, 32>}, {transform_indices = @transform_1, window_bounds = array<i64: 16, 32>}, {pipeline_mode = #tpu.pipeline_mode<synchronous>, transform_indices = @transform_2, window_bounds = array<i64: 1, 32>}, {pipeline_mode = #tpu.pipeline_mode<synchronous>, transform_indices = @transform_3, window_bounds = array<i64: 1, 32>}, {transform_indices = @transform_4, window_bounds = array<i64: 16, 32>}]} {
    %c0 = arith.constant 0 : index
    %c0_0 = arith.constant 0 : index
    %0 = vector.load %arg1[%c0, %c0_0] : memref<16x32xf32, #tpu.memory_space<vmem>>, vector<16x32xf32>
    %c0_1 = arith.constant 0 : index
    %c0_2 = arith.constant 0 : index
    %1 = vector.load %arg2[%c0_1, %c0_2] : memref<16x32xf32, #tpu.memory_space<vmem>>, vector<16x32xf32>
    %2 = arith.addf %0, %1 : vector<16x32xf32>
    %cst = arith.constant dense<0.000000e+00> : vector<16xf32>
    %3 = vector.multi_reduction <add>, %2, %cst [1] : vector<16x32xf32> to vector<16xf32>
    %4 = vector.shape_cast %3 : vector<16xf32> to vector<16x1xf32>
    %cst_3 = arith.constant 3.200000e+01 : f32
    %5 = vector.broadcast %cst_3 : f32 to vector<16x1xf32>
    %6 = arith.divf %4, %5 : vector<16x1xf32>
    %7 = vector.broadcast %6 : vector<16x1xf32> to vector<16x32xf32>
    %8 = arith.subf %2, %7 : vector<16x32xf32>
    %9 = arith.mulf %8, %8 : vector<16x32xf32>
    %cst_4 = arith.constant dense<0.000000e+00> : vector<16xf32>
    %10 = vector.multi_reduction <add>, %9, %cst_4 [1] : vector<16x32xf32> to vector<16xf32>
    %11 = vector.shape_cast %10 : vector<16xf32> to vector<16x1xf32>
    %cst_5 = arith.constant 3.200000e+01 : f32
    %12 = vector.broadcast %cst_5 : f32 to vector<16x1xf32>
    %13 = arith.divf %11, %12 : vector<16x1xf32>
    %cst_6 = arith.constant 9.99999974E-6 : f32
    %14 = vector.broadcast %cst_6 : f32 to vector<16x1xf32>
    %15 = arith.addf %13, %14 : vector<16x1xf32>
    %16 = math.rsqrt %15 : vector<16x1xf32>
    %17 = vector.broadcast %16 : vector<16x1xf32> to vector<16x32xf32>
    %18 = arith.mulf %8, %17 : vector<16x32xf32>
    %c0_7 = arith.constant 0 : index
    %c0_8 = arith.constant 0 : index
    %19 = vector.load %arg3[%c0_7, %c0_8] : memref<1x32xf32, #tpu.memory_space<vmem>>, vector<1x32xf32>
    %20 = vector.broadcast %19 : vector<1x32xf32> to vector<16x32xf32>
    %21 = arith.mulf %18, %20 : vector<16x32xf32>
    %c0_9 = arith.constant 0 : index
    %c0_10 = arith.constant 0 : index
    %22 = vector.load %arg4[%c0_9, %c0_10] : memref<1x32xf32, #tpu.memory_space<vmem>>, vector<1x32xf32>
    %23 = vector.broadcast %22 : vector<1x32xf32> to vector<16x32xf32>
    %24 = arith.addf %21, %23 : vector<16x32xf32>
    %c0_11 = arith.constant 0 : index
    %c0_12 = arith.constant 0 : index
    %25 = vector.load %arg5[%c0_11, %c0_12] : memref<16x32xf32, #tpu.memory_space<vmem>>, vector<16x32xf32>
    tpu.vector_store %arg5[%c0_11, %c0_12], %24 {strides = array<i32>} : memref<16x32xf32, #tpu.memory_space<vmem>>, vector<16x32xf32>,
    return
  }
  func.func @transform_0(%arg0: i32) -> (i32, i32) {
    %c0_i32 = arith.constant 0 : i32
    %c0_i32_0 = arith.constant 0 : i32
    return %arg0, %c0_i32 : i32, i32
  }
  func.func @transform_1(%arg0: i32) -> (i32, i32) {
    %c0_i32 = arith.constant 0 : i32
    %c0_i32_0 = arith.constant 0 : i32
    return %arg0, %c0_i32 : i32, i32
  }
  func.func @transform_2(%arg0: i32) -> (i32, i32) {
    %c0_i32 = arith.constant 0 : i32
    %c0_i32_0 = arith.constant 0 : i32
    %c0_i32_1 = arith.constant 0 : i32
    return %c0_i32, %c0_i32_0 : i32, i32
  }
  func.func @transform_3(%arg0: i32) -> (i32, i32) {
    %c0_i32 = arith.constant 0 : i32
    %c0_i32_0 = arith.constant 0 : i32
    %c0_i32_1 = arith.constant 0 : i32
    return %c0_i32, %c0_i32_0 : i32, i32
  }
  func.func @transform_4(%arg0: i32) -> (i32, i32) {
    %c0_i32 = arith.constant 0 : i32
    %c0_i32_0 = arith.constant 0 : i32
    return %arg0, %c0_i32 : i32, i32
  }
}

module attributes {stable_mosaic.version = 11 : i64} {
  func.func @_matmul_kernel(%arg0: i32, %arg1: i32, %arg2: i32, %arg3: memref<16x128xf32, #tpu.memory_space<vmem>>, %arg4: memref<32x128xf32, #tpu.memory_space<vmem>>, %arg5: memref<1x32xf32, #tpu.memory_space<vmem>>, %arg6: memref<16x32xf32, #tpu.memory_space<vmem>>, %arg7: memref<16x32xf32, #tpu.memory_space<vmem>>) attributes {dimension_semantics = [#tpu.dimension_semantics<parallel>, #tpu.dimension_semantics<parallel>, #tpu.dimension_semantics<arbitrary>], iteration_bounds = array<i64: 1, 1, 1>, scalar_prefetch = 0 : i64, scratch_operands = 1 : i64, tpu.core_type = #tpu.core_type<tc>, window_params = [{transform_indices = @transform_0, window_bounds = array<i64: 16, 128>}, {transform_indices = @transform_1, window_bounds = array<i64: 32, 128>}, {transform_indices = @transform_2, window_bounds = array<i64: 1, 32>}, {transform_indices = @transform_3, window_bounds = array<i64: 16, 32>}]} {
    %c0_i32 = arith.constant 0 : i32
    %0 = arith.cmpi eq, %arg2, %c0_i32 : i32
    %1 = arith.extui %0 : i1 to i32
    %c0_i32_0 = arith.constant 0 : i32
    %2 = arith.cmpi ne, %1, %c0_i32_0 : i32
    scf.if %2 {
      %cst_10 = arith.constant 0.000000e+00 : f32
      %12 = vector.broadcast %cst_10 : f32 to vector<16x32xf32>
      %c0_11 = arith.constant 0 : index
      %c0_12 = arith.constant 0 : index
      %13 = vector.load %arg7[%c0_11, %c0_12] : memref<16x32xf32, #tpu.memory_space<vmem>>, vector<16x32xf32>
      tpu.vector_store %arg7[%c0_11, %c0_12], %12 {strides = array<i32>} : memref<16x32xf32, #tpu.memory_space<vmem>>, vector<16x32xf32>,
    } else {
    }
    %c0 = arith.constant 0 : index
    %c0_1 = arith.constant 0 : index
    %3 = vector.load %arg7[%c0, %c0_1] : memref<16x32xf32, #tpu.memory_space<vmem>>, vector<16x32xf32>
    %c0_2 = arith.constant 0 : index
    %c0_3 = arith.constant 0 : index
    %4 = vector.load %arg3[%c0_2, %c0_3] : memref<16x128xf32, #tpu.memory_space<vmem>>, vector<16x128xf32>
    %c0_4 = arith.constant 0 : index
    %c0_5 = arith.constant 0 : index
    %5 = vector.load %arg4[%c0_4, %c0_5] : memref<32x128xf32, #tpu.memory_space<vmem>>, vector<32x128xf32>
    %cst = arith.constant dense<0.000000e+00> : vector<16x32xf32>
    %6 = tpu.matmul %4, %5, %cst {dimension_numbers = #tpu.dot_dimension_numbers<[1], [1], [0], [0], [0, 0, 1, 0], [], []>} : vector<16x128xf32>, vector<32x128xf32>, vector<16x32xf32> -> vector<16x32xf32>
    %7 = arith.addf %3, %6 : vector<16x32xf32>
    %c0_6 = arith.constant 0 : index
    %c0_7 = arith.constant 0 : index
    %8 = vector.load %arg7[%c0_6, %c0_7] : memref<16x32xf32, #tpu.memory_space<vmem>>, vector<16x32xf32>
    tpu.vector_store %arg7[%c0_6, %c0_7], %7 {strides = array<i32>} : memref<16x32xf32, #tpu.memory_space<vmem>>, vector<16x32xf32>,
    %c0_i32_8 = arith.constant 0 : i32
    %9 = arith.cmpi eq, %arg2, %c0_i32_8 : i32
    %10 = arith.extui %9 : i1 to i32
    %c0_i32_9 = arith.constant 0 : i32
    %11 = arith.cmpi ne, %10, %c0_i32_9 : i32
    scf.if %11 {
      %c0_10 = arith.constant 0 : index
      %c0_11 = arith.constant 0 : index
      %12 = vector.load %arg7[%c0_10, %c0_11] : memref<16x32xf32, #tpu.memory_space<vmem>>, vector<16x32xf32>
      %c0_12 = arith.constant 0 : index
      %c0_13 = arith.constant 0 : index
      %13 = vector.load %arg5[%c0_12, %c0_13] : memref<1x32xf32, #tpu.memory_space<vmem>>, vector<1x32xf32>
      %14 = vector.broadcast %13 : vector<1x32xf32> to vector<16x32xf32>
      %15 = arith.addf %12, %14 : vector<16x32xf32>
      %c0_14 = arith.constant 0 : index
      %c0_15 = arith.constant 0 : index
      %16 = vector.load %arg6[%c0_14, %c0_15] : memref<16x32xf32, #tpu.memory_space<vmem>>, vector<16x32xf32>
      tpu.vector_store %arg6[%c0_14, %c0_15], %15 {strides = array<i32>} : memref<16x32xf32, #tpu.memory_space<vmem>>, vector<16x32xf32>,
    } else {
    }
    return
  }
  func.func @transform_0(%arg0: i32, %arg1: i32, %arg2: i32) -> (i32, i32) {
    %c0_i32 = arith.constant 0 : i32
    return %arg0, %arg2 : i32, i32
  }
  func.func @transform_1(%arg0: i32, %arg1: i32, %arg2: i32) -> (i32, i32) {
    %c0_i32 = arith.constant 0 : i32
    return %arg1, %arg2 : i32, i32
  }
  func.func @transform_2(%arg0: i32, %arg1: i32, %arg2: i32) -> (i32, i32) {
    %c0_i32 = arith.constant 0 : i32
    %c0_i32_0 = arith.constant 0 : i32
    return %c0_i32, %arg1 : i32, i32
  }
  func.func @transform_3(%arg0: i32, %arg1: i32, %arg2: i32) -> (i32, i32) {
    %c0_i32 = arith.constant 0 : i32
    return %arg0, %arg1 : i32, i32
  }
}

</mosaic_0001>

<llo_original>
// kernel: transformer_block_forward.10
$region0: #{transformer_block_forward.10}
  #allocation0 [shape = 'u32[]', space=smem, size = 0x4, offset = 0x4, fixed_abs, tag = 'smem constant byte address 0x4 - core index']
  #allocation1 [shape = 'u32[144,128]{1,0:T(1,128)}', space=vmem, size = 0x12000, scoped, tag = 'internal scratch']
  %s0 = inlined_call_operand.vmem [shape: f32[16,32], index: 0, kind: input, shape index: {}]
  %s1 = inlined_call_operand.vmem [shape: f32[16,32], index: 1, kind: input, shape index: {}]
  %s2 = inlined_call_operand.vmem [shape: f32[1,32], index: 2, kind: input, shape index: {}]
  %s3 = inlined_call_operand.vmem [shape: f32[1,32], index: 3, kind: input, shape index: {}]
  %s4 = inlined_call_operand.vmem [shape: f32[16,32], index: 4, kind: output, shape index: {}]
  %s5 = sld [smem:[#allocation0]]
  $region26: #{transformer_block_forward.10} parent=0
    _
  %s7 = ssub.s32 1, %s5
  %s8 = scalar_select 0, %s7, %s5
  // Predicated region
  $region2: #{transformer_block_forward.10} parent=0 // pred_check
    _
  $region3: #{transformer_block_forward.10} parent=0 // pred_check_branch
    %10 = sbr.rel (0) target = $region5
  $region4: #{transformer_block_forward.10} parent=0 // pred_region
    _
  $region5: #{transformer_block_forward.10} parent=0 // pred_fallthru
    _
  // Predicated region
  $region6: #{transformer_block_forward.10} parent=0 // pred_check
    _
  $region7: #{transformer_block_forward.10} parent=0 // pred_check_branch
    %12 = sbr.rel (0) target = $region9
  $region8: #{transformer_block_forward.10} parent=0 // pred_region
    _
  $region9: #{transformer_block_forward.10} parent=0 // pred_fallthru
    _
  // Predicated region
  $region10: #{transformer_block_forward.10} parent=0 // pred_check
    _
  $region11: #{transformer_block_forward.10} parent=0 // pred_check_branch
    %14 = sbr.rel (0) target = $region13
  $region12: #{transformer_block_forward.10} parent=0 // pred_region
    _
  $region13: #{transformer_block_forward.10} parent=0 // pred_fallthru
    _
  // Predicated region
  $region14: #{transformer_block_forward.10} parent=0 // pred_check
    _
  $region15: #{transformer_block_forward.10} parent=0 // pred_check_branch
    %16 = sbr.rel (0) target = $region17
  $region16: #{transformer_block_forward.10} parent=0 // pred_region
    _
  $region17: #{transformer_block_forward.10} parent=0 // pred_fallthru
    _
  %v17 = vld [vmem:[%s0] sm:$0xff]
  %v18 = vld [vmem:[%s0 + $0x8] sm:$0xff]
  %v19 = vld [vmem:[%s1] sm:$0xff]
  %v20 = vld [vmem:[%s1 + $0x8] sm:$0xff]
  %v21 = vadd.f32 %v17, %v19
  %v22 = vadd.f32 %v18, %v20
  %vm23 = vcmask 261120
  %v24 = vsel %vm23, %v21, 0.0
  %25 = vadd.xlane.f32.xlu0 %v24
  %v26 = vpop.xlane.xlu0 %25
  %v27 = vsel %vm23, %v22, 0.0
  %28 = vadd.xlane.f32.xlu0 %v27
  %v29 = vpop.xlane.xlu0 %28
  %v30 = vrcp.pop 32.0
  %v31 = vmul.f32 %v26, %v30
  %v32 = vmul.f32 %v29, %v30
  %v33 = vsub.f32 %v21, %v31
  %v34 = vsub.f32 %v22, %v32
  %v35 = vmul.f32 %v33, %v33
  %v36 = vmul.f32 %v34, %v34
  %v37 = vsel %vm23, %v35, 0.0
  %38 = vadd.xlane.f32.xlu0 %v37
  %v39 = vpop.xlane.xlu0 %38
  %v40 = vsel %vm23, %v36, 0.0
  %41 = vadd.xlane.f32.xlu0 %v40
  %v42 = vpop.xlane.xlu0 %41
  %v43 = vmul.f32 %v39, %v30
  %v44 = vmul.f32 %v42, %v30
  %v45 = vadd.f32 %v43, 1e-05
  %v46 = vadd.f32 %v44, 1e-05
  %v47 = vrsqrt.pop %v45
  %v48 = vrsqrt.pop %v46
  %v49 = vmul.f32 %v33, %v47
  %v50 = vmul.f32 %v34, %v48
  %v51 = vld [vmem:[%s2] sm:$0x1]
  %v53 = vlaneseq
  %v54 = vshrl.u32 %v53, 7
  %v55 = vsub.s32 0, %v54
  %v56 = vrot.slane %v51, %v55
  %v58 = vmul.f32 %v49, %v56
  %v59 = vmul.f32 %v50, %v56
  %v60 = vld [vmem:[%s3] sm:$0x1]
  %v62 = vlaneseq
  %v63 = vshrl.u32 %v62, 7
  %v64 = vsub.s32 0, %v63
  %v65 = vrot.slane %v60, %v64
  %v67 = vadd.f32 %v58, %v65
  %v68 = vadd.f32 %v59, %v65
  %69 = vst.msk [vmem:[%s4] sm:$0xff] %vm23, %v67
  %70 = vst.msk [vmem:[%s4 + $0x8] sm:$0xff] %vm23, %v68
  // Predicated region
  $region18: #{transformer_block_forward.10} parent=0 // pred_check
    _
  $region19: #{transformer_block_forward.10} parent=0 // pred_check_branch
    %72 = sbr.rel (0) target = $region21
  $region20: #{transformer_block_forward.10} parent=0 // pred_region
    _
  $region21: #{transformer_block_forward.10} parent=0 // pred_fallthru
    _
  // Predicated region
  $region22: #{transformer_block_forward.10} parent=0 // pred_check
    _
  $region23: #{transformer_block_forward.10} parent=0 // pred_check_branch
    %74 = sbr.rel (0) target = $region25
  $region24: #{transformer_block_forward.10} parent=0 // pred_region
    _
  $region25: #{transformer_block_forward.10} parent=0 // pred_fallthru
    _

// kernel: transformer_block_forward.7
$region0: #{transformer_block_forward.7}
  #allocation0 [shape = 'u32[]', space=smem, size = 0x4, offset = 0x4, fixed_abs, tag = 'smem constant byte address 0x4 - core index']
  #allocation1 [shape = 'u32[144,128]{1,0:T(1,128)}', space=vmem, size = 0x12000, scoped, tag = 'internal scratch']
  #allocation2 [shape = 'f32[16,96]{1,0:T(8,128)}', space=vmem, size = 0x2000, scoped, tag = 'scratch operand']
  %s0 = inlined_call_operand.vmem [shape: f32[16,32], index: 0, kind: input, shape index: {}]
  %s1 = inlined_call_operand.vmem [shape: f32[96,32], index: 1, kind: input, shape index: {}]
  %s2 = inlined_call_operand.vmem [shape: f32[1,96], index: 2, kind: input, shape index: {}]
  %s3 = inlined_call_operand.vmem [shape: f32[16,96], index: 3, kind: output, shape index: {}]
  %s4 = sld [smem:[#allocation0]]
  $region30: #{transformer_block_forward.7} parent=0
    _
  %s6 = ssub.s32 1, %s4
  %s7 = scalar_select 0, %s6, %s4
  // Predicated region
  $region2: #{transformer_block_forward.7} parent=0 // pred_check
    _
  $region3: #{transformer_block_forward.7} parent=0 // pred_check_branch
    %9 = sbr.rel (0) target = $region5
  $region4: #{transformer_block_forward.7} parent=0 // pred_region
    _
  $region5: #{transformer_block_forward.7} parent=0 // pred_fallthru
    _
  // Predicated region
  $region6: #{transformer_block_forward.7} parent=0 // pred_check
    _
  $region7: #{transformer_block_forward.7} parent=0 // pred_check_branch
    %11 = sbr.rel (0) target = $region9
  $region8: #{transformer_block_forward.7} parent=0 // pred_region
    _
  $region9: #{transformer_block_forward.7} parent=0 // pred_fallthru
    _
  // Predicated region
  $region10: #{transformer_block_forward.7} parent=0 // pred_check
    _
  $region11: #{transformer_block_forward.7} parent=0 // pred_check_branch
    %13 = sbr.rel (0) target = $region13
  $region12: #{transformer_block_forward.7} parent=0 // pred_region
    _
  $region13: #{transformer_block_forward.7} parent=0 // pred_fallthru
    _
  %p14 = scmp.eq.s32.totalorder 0, 0
  // Predicated region
  $region14: #{transformer_block_forward.7} parent=0 // pred_check
    %p15 = pneg %p14
  $region15: #{transformer_block_forward.7} parent=0 // pred_check_branch
    %17 = sbr.rel (%p15) target = $region17
  $region16: #{transformer_block_forward.7} parent=0 // pred_region
    %vm18 = vcmask 785408
    %19 = vst.msk [vmem:[#allocation2] sm:$0xff] %vm18, 0.0
    %20 = vst.msk [vmem:[#allocation2 + $0x8] sm:$0xff] %vm18, 0.0
  $region17: #{transformer_block_forward.7} parent=0 // pred_fallthru
    _
  %v21 = vld [vmem:[#allocation2] sm:$0xff]
  %v22 = vld [vmem:[#allocation2 + $0x8] sm:$0xff]
  %v23 = vld [vmem:[%s0] sm:$0xff]
  %v24 = vld [vmem:[%s0 + $0x8] sm:$0xff]
  %v25 = vld [vmem:[%s1] sm:$0xff]
  %v26 = vld [vmem:[%s1 + $0x8] sm:$0xff]
  %v27 = vld [vmem:[%s1 + $0x10] sm:$0xff]
  %v28 = vld [vmem:[%s1 + $0x18] sm:$0xff]
  %v29 = vld [vmem:[%s1 + $0x20] sm:$0xff]
  %v30 = vld [vmem:[%s1 + $0x28] sm:$0xff]
  %v31 = vld [vmem:[%s1 + $0x30] sm:$0xff]
  %v32 = vld [vmem:[%s1 + $0x38] sm:$0xff]
  %v33 = vld [vmem:[%s1 + $0x40] sm:$0xff]
  %v34 = vld [vmem:[%s1 + $0x48] sm:$0xff]
  %v35 = vld [vmem:[%s1 + $0x50] sm:$0xff]
  %v36 = vld [vmem:[%s1 + $0x58] sm:$0xff]
  %vm37 = vcmask 261120
  %v39 = vsel %vm37, %v23, 0
  %v42 = vsel %vm37, %v24, 0
  %v45 = vsel %vm37, %v25, 0
  %v48 = vsel %vm37, %v26, 0
  %v51 = vsel %vm37, %v27, 0
  %v54 = vsel %vm37, %v28, 0
  %v57 = vsel %vm37, %v29, 0
  %v60 = vsel %vm37, %v30, 0
  %v63 = vsel %vm37, %v31, 0
  %v66 = vsel %vm37, %v32, 0
  %v69 = vsel %vm37, %v33, 0
  %v72 = vsel %vm37, %v34, 0
  %v75 = vsel %vm37, %v35, 0
  %v78 = vsel %vm37, %v36, 0
  %80 = vmatprep.subr.mxu0 0.0
  %81 = vmatpush1.xpose.msra.mxu0 0.0
  %82 = vmatprep.subr.mxu0 0.0
  %83 = vmatpush1.xpose.msra.mxu0 0.0
  %84 = vmatprep.subr.mxu0 0.0
  %85 = vmatpush1.xpose.msra.mxu0 0.0
  %86 = vmatprep.subr.mxu0 0.0
  %87 = vmatpush1.xpose.msra.mxu0 0.0
  %88 = vmatprep.subr.mxu0 0.0
  %89 = vmatpush1.xpose.msra.mxu0 %v78
  %90 = vmatprep.subr.mxu0 0.0
  %91 = vmatpush1.xpose.msra.mxu0 %v75
  %92 = vmatprep.subr.mxu0 0.0
  %93 = vmatpush1.xpose.msra.mxu0 %v72
  %94 = vmatprep.subr.mxu0 0.0
  %95 = vmatpush1.xpose.msra.mxu0 %v69
  %96 = vmatprep.subr.mxu0 0.0
  %97 = vmatpush1.xpose.msra.mxu0 %v66
  %98 = vmatprep.subr.mxu0 0.0
  %99 = vmatpush1.xpose.msra.mxu0 %v63
  %100 = vmatprep.subr.mxu0 0.0
  %101 = vmatpush1.xpose.msra.mxu0 %v60
  %102 = vmatprep.subr.mxu0 0.0
  %103 = vmatpush1.xpose.msra.mxu0 %v57
  %104 = vmatprep.subr.mxu0 0.0
  %105 = vmatpush1.xpose.msra.mxu0 %v54
  %106 = vmatprep.subr.mxu0 0.0
  %107 = vmatpush1.xpose.msra.mxu0 %v51
  %108 = vmatprep.subr.mxu0 0.0
  %109 = vmatpush1.xpose.msra.mxu0 %v48
  %110 = vmatprep.subr.mxu0 0.0
  %111 = vmatpush1.xpose.msra.mxu0 %v45
  %112 = vmatprep.subr.mxu0 0.0
  %113 = vmatpush2.xpose.msra.mxu0 0.0
  %114 = vmatprep.subr.mxu0 0.0
  %115 = vmatpush2.xpose.msra.mxu0 0.0
  %116 = vmatprep.subr.mxu0 0.0
  %117 = vmatpush2.xpose.msra.mxu0 0.0
  %118 = vmatprep.subr.mxu0 0.0
  %119 = vmatpush2.xpose.msra.mxu0 0.0
  %120 = vmatprep.subr.mxu0 0.0
  %121 = vmatpush2.xpose.msra.mxu0 0.0
  %122 = vmatprep.subr.mxu0 0.0
  %123 = vmatpush2.xpose.msra.mxu0 0.0
  %124 = vmatprep.subr.mxu0 0.0
  %125 = vmatpush2.xpose.msra.mxu0 0.0
  %126 = vmatprep.subr.mxu0 0.0
  %127 = vmatpush2.xpose.msra.mxu0 0.0
  %128 = vmatprep.subr.mxu0 0.0
  %129 = vmatpush2.xpose.msra.mxu0 0.0
  %130 = vmatprep.subr.mxu0 0.0
  %131 = vmatpush2.xpose.msra.mxu0 0.0
  %132 = vmatprep.subr.mxu0 0.0
  %133 = vmatpush2.xpose.msra.mxu0 0.0
  %134 = vmatprep.subr.mxu0 0.0
  %135 = vmatpush2.xpose.msra.mxu0 0.0
  %136 = vmatprep.subr.mxu0 0.0
  %137 = vmatpush2.xpose.msra.mxu0 0.0
  %138 = vmatprep.subr.mxu0 0.0
  %139 = vmatpush2.xpose.msra.mxu0 0.0
  %140 = vmatprep.subr.mxu0 0.0
  %141 = vmatpush2.xpose.msra.mxu0 0.0
  %142 = vmatprep.subr.mxu0 0.0
  %143 = vmatpush2.xpose.msra.mxu0 0.0
  %144 = vmatprep.mubr.f32.mxu0 0.0
  %145 = vmatmul.mubr.f32.gmra.mxu0 %v39
  %v146 = vpop.f32.mrf.mxu0
  %v147 = vadd.f32 0.0, %v146
  %v148 = vpop.f32.mrf.mxu0
  %149 = vmatprep.mubr.f32.mxu0 0.0
  %150 = vmatmul.mubr.f32.gmra.mxu0 %v42
  %v151 = vpop.f32.mrf.mxu0
  %v152 = vadd.f32 0.0, %v151
  %v153 = vpop.f32.mrf.mxu0
  %154 = vdwg.mxu0
  %v155 = vadd.f32 %v21, %v147
  %v156 = vadd.f32 %v22, %v152
  %vm157 = vcmask 785408
  %158 = vst.msk [vmem:[#allocation2] sm:$0xff] %vm157, %v155
  %159 = vst.msk [vmem:[#allocation2 + $0x8] sm:$0xff] %vm157, %v156
  // Predicated region
  $region18: #{transformer_block_forward.7} parent=0 // pred_check
    %p160 = pneg %p14
  $region19: #{transformer_block_forward.7} parent=0 // pred_check_branch
    %162 = sbr.rel (%p160) target = $region21
  $region20: #{transformer_block_forward.7} parent=0 // pred_region
    %v163 = vld [vmem:[#allocation2] sm:$0xff]
    %v164 = vld [vmem:[#allocation2 + $0x8] sm:$0xff]
    %v165 = vld [vmem:[%s2] sm:$0x1]
    %v167 = vlaneseq
    %v168 = vshrl.u32 %v167, 7
    %v169 = vsub.s32 0, %v168
    %v170 = vrot.slane %v165, %v169
    %v172 = vadd.f32 %v163, %v170
    %v173 = vadd.f32 %v164, %v170
    %174 = vst.msk [vmem:[%s3] sm:$0xff] %vm157, %v172
    %175 = vst.msk [vmem:[%s3 + $0x8] sm:$0xff] %vm157, %v173
  $region21: #{transformer_block_forward.7} parent=0 // pred_fallthru
    _
  // Predicated region
  $region22: #{transformer_block_forward.7} parent=0 // pred_check
    _
  $region23: #{transformer_block_forward.7} parent=0 // pred_check_branch
    %177 = sbr.rel (0) target = $region25
  $region24: #{transformer_block_forward.7} parent=0 // pred_region
    _
  $region25: #{transformer_block_forward.7} parent=0 // pred_fallthru
    _
  // Predicated region
  $region26: #{transformer_block_forward.7} parent=0 // pred_check
    _
  $region27: #{transformer_block_forward.7} parent=0 // pred_check_branch
    %179 = sbr.rel (0) target = $region29
  $region28: #{transformer_block_forward.7} parent=0 // pred_region
    _
  $region29: #{transformer_block_forward.7} parent=0 // pred_fallthru
    _

// kernel: transformer_block_forward.9
$region0: #{transformer_block_forward.9}
  #allocation0 [shape = 'u32[]', space=smem, size = 0x4, offset = 0x4, fixed_abs, tag = 'smem constant byte address 0x4 - core index']
  #allocation1 [shape = 'u32[144,128]{1,0:T(1,128)}', space=vmem, size = 0x12000, scoped, tag = 'internal scratch']
  #allocation2 [shape = 'f32[16,32]{1,0:T(8,128)}', space=vmem, size = 0x2000, scoped, tag = 'scratch operand']
  %s0 = inlined_call_operand.vmem [shape: f32[16,32], index: 0, kind: input, shape index: {}]
  %s1 = inlined_call_operand.vmem [shape: f32[32,32], index: 1, kind: input, shape index: {}]
  %s2 = inlined_call_operand.vmem [shape: f32[1,32], index: 2, kind: input, shape index: {}]
  %s3 = inlined_call_operand.vmem [shape: f32[16,32], index: 3, kind: output, shape index: {}]
  %s4 = sld [smem:[#allocation0]]
  $region30: #{transformer_block_forward.9} parent=0
    _
  %s6 = ssub.s32 1, %s4
  %s7 = scalar_select 0, %s6, %s4
  // Predicated region
  $region2: #{transformer_block_forward.9} parent=0 // pred_check
    _
  $region3: #{transformer_block_forward.9} parent=0 // pred_check_branch
    %9 = sbr.rel (0) target = $region5
  $region4: #{transformer_block_forward.9} parent=0 // pred_region
    _
  $region5: #{transformer_block_forward.9} parent=0 // pred_fallthru
    _
  // Predicated region
  $region6: #{transformer_block_forward.9} parent=0 // pred_check
    _
  $region7: #{transformer_block_forward.9} parent=0 // pred_check_branch
    %11 = sbr.rel (0) target = $region9
  $region8: #{transformer_block_forward.9} parent=0 // pred_region
    _
  $region9: #{transformer_block_forward.9} parent=0 // pred_fallthru
    _
  // Predicated region
  $region10: #{transformer_block_forward.9} parent=0 // pred_check
    _
  $region11: #{transformer_block_forward.9} parent=0 // pred_check_branch
    %13 = sbr.rel (0) target = $region13
  $region12: #{transformer_block_forward.9} parent=0 // pred_region
    _
  $region13: #{transformer_block_forward.9} parent=0 // pred_fallthru
    _
  %p14 = scmp.eq.s32.totalorder 0, 0
  // Predicated region
  $region14: #{transformer_block_forward.9} parent=0 // pred_check
    %p15 = pneg %p14
  $region15: #{transformer_block_forward.9} parent=0 // pred_check_branch
    %17 = sbr.rel (%p15) target = $region17
  $region16: #{transformer_block_forward.9} parent=0 // pred_region
    %vm18 = vcmask 261120
    %19 = vst.msk [vmem:[#allocation2] sm:$0xff] %vm18, 0.0
    %20 = vst.msk [vmem:[#allocation2 + $0x8] sm:$0xff] %vm18, 0.0
  $region17: #{transformer_block_forward.9} parent=0 // pred_fallthru
    _
  %v21 = vld [vmem:[#allocation2] sm:$0xff]
  %v22 = vld [vmem:[#allocation2 + $0x8] sm:$0xff]
  %v23 = vld [vmem:[%s0] sm:$0xff]
  %v24 = vld [vmem:[%s0 + $0x8] sm:$0xff]
  %v25 = vld [vmem:[%s1] sm:$0xff]
  %v26 = vld [vmem:[%s1 + $0x8] sm:$0xff]
  %v27 = vld [vmem:[%s1 + $0x10] sm:$0xff]
  %v28 = vld [vmem:[%s1 + $0x18] sm:$0xff]
  %vm29 = vcmask 261120
  %v31 = vsel %vm29, %v23, 0
  %v34 = vsel %vm29, %v24, 0
  %v37 = vsel %vm29, %v25, 0
  %v40 = vsel %vm29, %v26, 0
  %v43 = vsel %vm29, %v27, 0
  %v46 = vsel %vm29, %v28, 0
  %48 = vmatprep.subr.mxu0 0.0
  %49 = vmatpush1.xpose.msra.mxu0 0.0
  %50 = vmatprep.subr.mxu0 0.0
  %51 = vmatpush1.xpose.msra.mxu0 0.0
  %52 = vmatprep.subr.mxu0 0.0
  %53 = vmatpush1.xpose.msra.mxu0 0.0
  %54 = vmatprep.subr.mxu0 0.0
  %55 = vmatpush1.xpose.msra.mxu0 0.0
  %56 = vmatprep.subr.mxu0 0.0
  %57 = vmatpush1.xpose.msra.mxu0 0.0
  %58 = vmatprep.subr.mxu0 0.0
  %59 = vmatpush1.xpose.msra.mxu0 0.0
  %60 = vmatprep.subr.mxu0 0.0
  %61 = vmatpush1.xpose.msra.mxu0 0.0
  %62 = vmatprep.subr.mxu0 0.0
  %63 = vmatpush1.xpose.msra.mxu0 0.0
  %64 = vmatprep.subr.mxu0 0.0
  %65 = vmatpush1.xpose.msra.mxu0 0.0
  %66 = vmatprep.subr.mxu0 0.0
  %67 = vmatpush1.xpose.msra.mxu0 0.0
  %68 = vmatprep.subr.mxu0 0.0
  %69 = vmatpush1.xpose.msra.mxu0 0.0
  %70 = vmatprep.subr.mxu0 0.0
  %71 = vmatpush1.xpose.msra.mxu0 0.0
  %72 = vmatprep.subr.mxu0 0.0
  %73 = vmatpush1.xpose.msra.mxu0 %v46
  %74 = vmatprep.subr.mxu0 0.0
  %75 = vmatpush1.xpose.msra.mxu0 %v43
  %76 = vmatprep.subr.mxu0 0.0
  %77 = vmatpush1.xpose.msra.mxu0 %v40
  %78 = vmatprep.subr.mxu0 0.0
  %79 = vmatpush1.xpose.msra.mxu0 %v37
  %80 = vmatprep.subr.mxu0 0.0
  %81 = vmatpush2.xpose.msra.mxu0 0.0
  %82 = vmatprep.subr.mxu0 0.0
  %83 = vmatpush2.xpose.msra.mxu0 0.0
  %84 = vmatprep.subr.mxu0 0.0
  %85 = vmatpush2.xpose.msra.mxu0 0.0
  %86 = vmatprep.subr.mxu0 0.0
  %87 = vmatpush2.xpose.msra.mxu0 0.0
  %88 = vmatprep.subr.mxu0 0.0
  %89 = vmatpush2.xpose.msra.mxu0 0.0
  %90 = vmatprep.subr.mxu0 0.0
  %91 = vmatpush2.xpose.msra.mxu0 0.0
  %92 = vmatprep.subr.mxu0 0.0
  %93 = vmatpush2.xpose.msra.mxu0 0.0
  %94 = vmatprep.subr.mxu0 0.0
  %95 = vmatpush2.xpose.msra.mxu0 0.0
  %96 = vmatprep.subr.mxu0 0.0
  %97 = vmatpush2.xpose.msra.mxu0 0.0
  %98 = vmatprep.subr.mxu0 0.0
  %99 = vmatpush2.xpose.msra.mxu0 0.0
  %100 = vmatprep.subr.mxu0 0.0
  %101 = vmatpush2.xpose.msra.mxu0 0.0
  %102 = vmatprep.subr.mxu0 0.0
  %103 = vmatpush2.xpose.msra.mxu0 0.0
  %104 = vmatprep.subr.mxu0 0.0
  %105 = vmatpush2.xpose.msra.mxu0 0.0
  %106 = vmatprep.subr.mxu0 0.0
  %107 = vmatpush2.xpose.msra.mxu0 0.0
  %108 = vmatprep.subr.mxu0 0.0
  %109 = vmatpush2.xpose.msra.mxu0 0.0
  %110 = vmatprep.subr.mxu0 0.0
  %111 = vmatpush2.xpose.msra.mxu0 0.0
  %112 = vmatprep.mubr.f32.mxu0 0.0
  %113 = vmatmul.mubr.f32.gmra.mxu0 %v31
  %v114 = vpop.f32.mrf.mxu0
  %v115 = vadd.f32 0.0, %v114
  %v116 = vpop.f32.mrf.mxu0
  %117 = vmatprep.mubr.f32.mxu0 0.0
  %118 = vmatmul.mubr.f32.gmra.mxu0 %v34
  %v119 = vpop.f32.mrf.mxu0
  %v120 = vadd.f32 0.0, %v119
  %v121 = vpop.f32.mrf.mxu0
  %122 = vdwg.mxu0
  %v123 = vadd.f32 %v21, %v115
  %v124 = vadd.f32 %v22, %v120
  %125 = vst.msk [vmem:[#allocation2] sm:$0xff] %vm29, %v123
  %126 = vst.msk [vmem:[#allocation2 + $0x8] sm:$0xff] %vm29, %v124
  // Predicated region
  $region18: #{transformer_block_forward.9} parent=0 // pred_check
    %p127 = pneg %p14
  $region19: #{transformer_block_forward.9} parent=0 // pred_check_branch
    %129 = sbr.rel (%p127) target = $region21
  $region20: #{transformer_block_forward.9} parent=0 // pred_region
    %v130 = vld [vmem:[#allocation2] sm:$0xff]
    %v131 = vld [vmem:[#allocation2 + $0x8] sm:$0xff]
    %v132 = vld [vmem:[%s2] sm:$0x1]
    %v134 = vlaneseq
    %v135 = vshrl.u32 %v134, 7
    %v136 = vsub.s32 0, %v135
    %v137 = vrot.slane %v132, %v136
    %v139 = vadd.f32 %v130, %v137
    %v140 = vadd.f32 %v131, %v137
    %141 = vst.msk [vmem:[%s3] sm:$0xff] %vm29, %v139
    %142 = vst.msk [vmem:[%s3 + $0x8] sm:$0xff] %vm29, %v140
  $region21: #{transformer_block_forward.9} parent=0 // pred_fallthru
    _
  // Predicated region
  $region22: #{transformer_block_forward.9} parent=0 // pred_check
    _
  $region23: #{transformer_block_forward.9} parent=0 // pred_check_branch
    %144 = sbr.rel (0) target = $region25
  $region24: #{transformer_block_forward.9} parent=0 // pred_region
    _
  $region25: #{transformer_block_forward.9} parent=0 // pred_fallthru
    _
  // Predicated region
  $region26: #{transformer_block_forward.9} parent=0 // pred_check
    _
  $region27: #{transformer_block_forward.9} parent=0 // pred_check_branch
    %146 = sbr.rel (0) target = $region29
  $region28: #{transformer_block_forward.9} parent=0 // pred_region
    _
  $region29: #{transformer_block_forward.9} parent=0 // pred_fallthru
    _

// kernel: transformer_block_forward.8
$region0: #{transformer_block_forward.8}
  #allocation0 [shape = 'u32[]', space=smem, size = 0x4, offset = 0x4, fixed_abs, tag = 'smem constant byte address 0x4 - core index']
  #allocation1 [shape = 'u32[144,128]{1,0:T(1,128)}', space=vmem, size = 0x12000, scoped, tag = 'internal scratch']
  #allocation2 [shape = 'f32[4,8,1]{2,1,0:T(8,128)}', space=vmem, size = 0x4000, scoped, tag = 'scratch operand']
  #allocation3 [shape = 'f32[4,8,1]{2,1,0:T(8,128)}', space=vmem, size = 0x4000, scoped, tag = 'scratch operand']
  #allocation4 [shape = 'f32[4,8,8]{2,1,0:T(8,128)}', space=vmem, size = 0x4000, scoped, tag = 'scratch operand']
  %s0 = inlined_call_operand.vmem [shape: f32[8,8,8], index: 0, kind: input, shape index: {}]
  %s1 = inlined_call_operand.vmem [shape: f32[8,8,8], index: 1, kind: input, shape index: {}]
  %s2 = inlined_call_operand.vmem [shape: f32[8,8,8], index: 2, kind: input, shape index: {}]
  %s3 = inlined_call_operand.vmem [shape: f32[8,8,8], index: 3, kind: output, shape index: {}]
  %s4 = sld [smem:[#allocation0]]
  $region57: #{transformer_block_forward.8} parent=0
    _
  %s6 = ssub.s32 1, %s4
  %s7 = scalar_select 0, %s6, %s4
  loop: start=0, step=1, limit=4
  $region2: #{transformer_block_forward.8} parent=0 // loop_pre_header
    _
  $region3: #{transformer_block_forward.8} parent=0 // loop_header
    %s9 = sphi 0, %s13
    %p10 = scmp.ge.s32.totalorder %s9, 4
    %s16 = sphi 0, %s35
    %s17 = sphi 0, %s31
    %s18 = sphi 0, %s27
    %s19 = sphi 0, %s16
    %s20 = sphi 0, %s17
    %s21 = sphi 0, %s18
    %s22 = sphi 0, %s19
    %s23 = sphi 0, %s20
    %s24 = sphi 0, %s21
    %s40 = sphi 0, %s42
    %s43 = sphi 0, %s40
    %s44 = sphi 0, %s43
    %s60 = sphi 0, %s44
    %s68 = sphi 0, %s70
    %s71 = sphi 0, %s68
    %s72 = sphi 0, %s71
    %s88 = sphi 0, %s72
    %s96 = sphi 0, %s98
    %s99 = sphi 0, %s96
    %s100 = sphi 0, %s99
    %s116 = sphi 0, %s100
    %s124 = sphi 0, %s126
    %s127 = sphi 0, %s124
    %s128 = sphi 0, %s127
    %s144 = sphi 0, %s128
  $region4: #{transformer_block_forward.8} parent=0 // loop_header_branch
    %12 = sbr.rel (%p10) target = $region8
  $region5: #{transformer_block_forward.8} parent=0 // loop_body
    %s14 = ssub.s32 %s9, 1
    %s15 = ssub.s32 %s9, 2
    %s25 = sadd.s32 1, %s18
    %p26 = scmp.ge.s32.totalorder %s25, 1
    %s27 = scalar_select %p26, 0, %s25
    %s28 = sadd.s32 1, %s17
    %s29 = scalar_select %p26, %s28, %s17
    %p30 = scmp.ge.s32.totalorder %s29, 1
    %s31 = scalar_select %p30, 0, %s29
    %s32 = sadd.s32 1, %s16
    %s33 = scalar_select %p30, %s32, %s16
    %p34 = scmp.ge.s32.totalorder %s33, 2
    %s35 = scalar_select %p34, 0, %s33
    %s36 = ssub.s32 %s16, %s35
    %s37 = ssub.s32 %s17, %s31
    %s38 = sor.u32 %s36, %s37
    %p39 = scmp.eq.s32.totalorder %s38, 0
    %s41 = sadd.s32 %s40, 1
    %s42 = scalar_select %p39, %s40, %s41
    %p45 = pneg %p39
    %p46 = scmp.eq.s32.totalorder %s9, 1
    %p47 = por %p45, %p46
    %p48 = scmp.ne.s32.totalorder %s40, %s43
    %p49 = scmp.eq.s32.totalorder %s9, 0
    %p50 = por %p48, %p49
    %p51 = scmp.ne.s32.totalorder %s40, %s43
    %p52 = scmp.eq.s32.totalorder %s14, 1
    %p53 = por %p51, %p52
    %p54 = scmp.ne.s32.totalorder %s43, %s44
    %p55 = scmp.eq.s32.totalorder %s14, 0
    %p56 = por %p54, %p55
    %p57 = scmp.ne.s32.totalorder %s43, %s44
    %p58 = scmp.eq.s32.totalorder %s15, 1
    %p59 = por %p57, %p58
    %p61 = scmp.ne.s32.totalorder %s44, %s60
    %p62 = scmp.eq.s32.totalorder %s15, 0
    %p63 = por %p61, %p62
    %s64 = ssub.s32 %s16, %s35
    %s65 = ssub.s32 %s18, %s27
    %s66 = sor.u32 %s64, %s65
    %p67 = scmp.eq.s32.totalorder %s66, 0
    %s69 = sadd.s32 %s68, 1
    %s70 = scalar_select %p67, %s68, %s69
    %p73 = pneg %p67
    %p74 = scmp.eq.s32.totalorder %s9, 1
    %p75 = por %p73, %p74
    %p76 = scmp.ne.s32.totalorder %s68, %s71
    %p77 = scmp.eq.s32.totalorder %s9, 0
    %p78 = por %p76, %p77
    %p79 = scmp.ne.s32.totalorder %s68, %s71
    %p80 = scmp.eq.s32.totalorder %s14, 1
    %p81 = por %p79, %p80
    %p82 = scmp.ne.s32.totalorder %s71, %s72
    %p83 = scmp.eq.s32.totalorder %s14, 0
    %p84 = por %p82, %p83
    %p85 = scmp.ne.s32.totalorder %s71, %s72
    %p86 = scmp.eq.s32.totalorder %s15, 1
    %p87 = por %p85, %p86
    %p89 = scmp.ne.s32.totalorder %s72, %s88
    %p90 = scmp.eq.s32.totalorder %s15, 0
    %p91 = por %p89, %p90
    %s92 = ssub.s32 %s16, %s35
    %s93 = ssub.s32 %s18, %s27
    %s94 = sor.u32 %s92, %s93
    %p95 = scmp.eq.s32.totalorder %s94, 0
    %s97 = sadd.s32 %s96, 1
    %s98 = scalar_select %p95, %s96, %s97
    %p101 = pneg %p95
    %p102 = scmp.eq.s32.totalorder %s9, 1
    %p103 = por %p101, %p102
    %p104 = scmp.ne.s32.totalorder %s96, %s99
    %p105 = scmp.eq.s32.totalorder %s9, 0
    %p106 = por %p104, %p105
    %p107 = scmp.ne.s32.totalorder %s96, %s99
    %p108 = scmp.eq.s32.totalorder %s14, 1
    %p109 = por %p107, %p108
    %p110 = scmp.ne.s32.totalorder %s99, %s100
    %p111 = scmp.eq.s32.totalorder %s14, 0
    %p112 = por %p110, %p111
    %p113 = scmp.ne.s32.totalorder %s99, %s100
    %p114 = scmp.eq.s32.totalorder %s15, 1
    %p115 = por %p113, %p114
    %p117 = scmp.ne.s32.totalorder %s100, %s116
    %p118 = scmp.eq.s32.totalorder %s15, 0
    %p119 = por %p117, %p118
    %s120 = ssub.s32 %s16, %s35
    %s121 = ssub.s32 %s17, %s31
    %s122 = sor.u32 %s120, %s121
    %p123 = scmp.eq.s32.totalorder %s122, 0
    %s125 = sadd.s32 %s124, 1
    %s126 = scalar_select %p123, %s124, %s125
    %p129 = pneg %p123
    %p130 = scmp.eq.s32.totalorder %s9, 1
    %p131 = por %p129, %p130
    %p132 = scmp.ne.s32.totalorder %s124, %s127
    %p133 = scmp.eq.s32.totalorder %s9, 0
    %p134 = por %p132, %p133
    %p135 = scmp.ne.s32.totalorder %s124, %s127
    %p136 = scmp.eq.s32.totalorder %s14, 1
    %p137 = por %p135, %p136
    %p138 = scmp.ne.s32.totalorder %s127, %s128
    %p139 = scmp.eq.s32.totalorder %s14, 0
    %p140 = por %p138, %p139
    %p141 = scmp.ne.s32.totalorder %s127, %s128
    %p142 = scmp.eq.s32.totalorder %s15, 1
    %p143 = por %p141, %p142
    %p145 = scmp.ne.s32.totalorder %s128, %s144
    %p146 = scmp.eq.s32.totalorder %s15, 0
    %p147 = por %p145, %p146
    %p148 = scmp.le.s32.totalorder 1, %s9
    %p149 = scmp.lt.s32.totalorder %s9, 3
    %p150 = pnand %p148, %p149
    %p151 = pneg %p150
    // Predicated region
    $region9: #{transformer_block_forward.8} parent=5 // pred_check
      _
    $region10: #{transformer_block_forward.8} parent=5 // pred_check_branch
      %153 = sbr.rel (%p150) target = $region12
    $region11: #{transformer_block_forward.8} parent=5 // pred_region
      %s154 = ssub.s32 %s9, 1
    $region12: #{transformer_block_forward.8} parent=5 // pred_fallthru
      _
    %p155 = scmp.lt.s32.totalorder %s9, 2
    // Predicated region
    $region13: #{transformer_block_forward.8} parent=5 // pred_check
      %p156 = pneg %p155
    $region14: #{transformer_block_forward.8} parent=5 // pred_check_branch
      %158 = sbr.rel (%p156) target = $region16
    $region15: #{transformer_block_forward.8} parent=5 // pred_region
      // Predicated region
      $region17: #{transformer_block_forward.8} parent=15 // pred_check
        %p159 = pneg %p50
      $region18: #{transformer_block_forward.8} parent=15 // pred_check_branch
        %161 = sbr.rel (%p159) target = $region20
      $region19: #{transformer_block_forward.8} parent=15 // pred_region
        %s162 = smul.u32 4, %s16
        %p163 = scmp.lt.s32.totalorder %s162, 7
        %s164 = scalar_select %p163, %s162, 7
        %p165 = scmp.lt.s32.totalorder %s17, 0
        %s166 = scalar_select %p165, %s17, 0
        %s167 = sadd.s32 %s166, %s164
        %s168 = smul.addr %s167, 8
        %s169 = scalar_lea.vmem %s0, %s168
        %s170 = smul.u32 4, %s16
      $region20: #{transformer_block_forward.8} parent=15 // pred_fallthru
        _
      // Predicated region
      $region21: #{transformer_block_forward.8} parent=15 // pred_check
        %p171 = pneg %p78
      $region22: #{transformer_block_forward.8} parent=15 // pred_check_branch
        %173 = sbr.rel (%p171) target = $region24
      $region23: #{transformer_block_forward.8} parent=15 // pred_region
        %s174 = smul.u32 4, %s16
        %p175 = scmp.lt.s32.totalorder %s174, 7
        %s176 = scalar_select %p175, %s174, 7
        %p177 = scmp.lt.s32.totalorder %s18, 0
        %s178 = scalar_select %p177, %s18, 0
        %s179 = sadd.s32 %s178, %s176
        %s180 = smul.addr %s179, 8
        %s181 = scalar_lea.vmem %s1, %s180
        %s182 = smul.u32 4, %s16
      $region24: #{transformer_block_forward.8} parent=15 // pred_fallthru
        _
      // Predicated region
      $region25: #{transformer_block_forward.8} parent=15 // pred_check
        %p183 = pneg %p106
      $region26: #{transformer_block_forward.8} parent=15 // pred_check_branch
        %185 = sbr.rel (%p183) target = $region28
      $region27: #{transformer_block_forward.8} parent=15 // pred_region
        %s186 = smul.u32 4, %s16
        %p187 = scmp.lt.s32.totalorder %s186, 7
        %s188 = scalar_select %p187, %s186, 7
        %p189 = scmp.lt.s32.totalorder %s18, 0
        %s190 = scalar_select %p189, %s18, 0
        %s191 = sadd.s32 %s190, %s188
        %s192 = smul.addr %s191, 8
        %s193 = scalar_lea.vmem %s2, %s192
        %s194 = smul.u32 4, %s16
      $region28: #{transformer_block_forward.8} parent=15 // pred_fallthru
        _
    $region16: #{transformer_block_forward.8} parent=5 // pred_fallthru
      _
    %p195 = scmp.le.s32.totalorder 1, %s9
    %p196 = scmp.lt.s32.totalorder %s9, 3
    %p197 = pnand %p195, %p196
    %p198 = pneg %p197
    // Predicated region
    $region29: #{transformer_block_forward.8} parent=5 // pred_check
      _
    $region30: #{transformer_block_forward.8} parent=5 // pred_check_branch
      %200 = sbr.rel (%p197) target = $region32
    $region31: #{transformer_block_forward.8} parent=5 // pred_region
      %s201 = ssub.s32 %s9, 1
      %s202 = smul.u32 4, %s19
      %p203 = scmp.lt.s32.totalorder %s202, 7
      %s204 = scalar_select %p203, %s202, 7
      %p205 = scmp.lt.s32.totalorder %s20, 0
      %s206 = scalar_select %p205, %s20, 0
      %s207 = sadd.s32 %s206, %s204
      %s208 = smul.addr %s207, 8
      %s209 = scalar_lea.vmem %s0, %s208
      %p210 = pneg %p56
      %p211 = pneg %p53
      %s212 = smul.u32 4, %s19
      %p213 = scmp.lt.s32.totalorder %s212, 7
      %s214 = scalar_select %p213, %s212, 7
      %p215 = scmp.lt.s32.totalorder %s21, 0
      %s216 = scalar_select %p215, %s21, 0
      %s217 = sadd.s32 %s216, %s214
      %s218 = smul.addr %s217, 8
      %s219 = scalar_lea.vmem %s1, %s218
      %p220 = pneg %p84
      %p221 = pneg %p81
      %s222 = smul.u32 4, %s19
      %p223 = scmp.lt.s32.totalorder %s222, 7
      %s224 = scalar_select %p223, %s222, 7
      %p225 = scmp.lt.s32.totalorder %s21, 0
      %s226 = scalar_select %p225, %s21, 0
      %s227 = sadd.s32 %s226, %s224
      %s228 = smul.addr %s227, 8
      %s229 = scalar_lea.vmem %s2, %s228
      %p230 = pneg %p112
      %p231 = pneg %p109
      %p232 = pneg %p140
      %p233 = pneg %p137
      %s234 = smul.u32 4, %s19
      %p235 = scmp.lt.s32.totalorder %s234, 7
      %s236 = scalar_select %p235, %s234, 7
      %p237 = scmp.lt.s32.totalorder %s20, 0
      %s238 = scalar_select %p237, %s20, 0
      %s239 = sadd.s32 %s238, %s236
      %s240 = smul.addr %s239, 8
      %s241 = scalar_lea.vmem %s3, %s240
      %s242 = smul.u32 4, %s19
      %p243 = scmp.lt.s32.totalorder %s242, 7
      %s244 = scalar_select %p243, %s242, 7
      %p245 = scmp.lt.s32.totalorder %s20, 0
      %s246 = scalar_select %p245, %s20, 0
      %s247 = sadd.s32 %s246, %s244
      %s248 = smul.addr %s247, 8
      %s249 = scalar_lea.vmem %s0, %s248
      %s250 = smul.u32 4, %s19
      %s251 = smul.u32 4, %s19
      %p252 = scmp.lt.s32.totalorder %s251, 7
      %s253 = scalar_select %p252, %s251, 7
      %p254 = scmp.lt.s32.totalorder %s21, 0
      %s255 = scalar_select %p254, %s21, 0
      %s256 = sadd.s32 %s255, %s253
      %s257 = smul.addr %s256, 8
      %s258 = scalar_lea.vmem %s1, %s257
      %s259 = smul.u32 4, %s19
      %s260 = smul.u32 4, %s19
      %p261 = scmp.lt.s32.totalorder %s260, 7
      %s262 = scalar_select %p261, %s260, 7
      %p263 = scmp.lt.s32.totalorder %s21, 0
      %s264 = scalar_select %p263, %s21, 0
      %s265 = sadd.s32 %s264, %s262
      %s266 = smul.addr %s265, 8
      %s267 = scalar_lea.vmem %s2, %s266
      %s268 = smul.u32 4, %s19
      %s269 = smul.u32 4, %s19
      %p270 = scmp.lt.s32.totalorder %s269, 7
      %s271 = scalar_select %p270, %s269, 7
      %p272 = scmp.lt.s32.totalorder %s20, 0
      %s273 = scalar_select %p272, %s20, 0
      %s274 = sadd.s32 %s273, %s271
      %s275 = smul.addr %s274, 8
      %s276 = scalar_lea.vmem %s3, %s275
      %s277 = smul.u32 4, %s19
      %p278 = scmp.eq.s32.totalorder %s21, 0
      // Predicated region
      $region33: #{transformer_block_forward.8} parent=31 // pred_check
        %p279 = pneg %p278
      $region34: #{transformer_block_forward.8} parent=31 // pred_check_branch
        %281 = sbr.rel (%p279) target = $region36
      $region35: #{transformer_block_forward.8} parent=31 // pred_region
        %vm282 = vcmask 7168
        %283 = vst.msk [vmem:[#allocation2] sm:$0xff] %vm282, -inf
        %284 = vst.msk [vmem:[#allocation2 + $0x8] sm:$0xff] %vm282, -inf
        %285 = vst.msk [vmem:[#allocation2 + $0x10] sm:$0xff] %vm282, -inf
        %286 = vst.msk [vmem:[#allocation2 + $0x18] sm:$0xff] %vm282, -inf
        %287 = vst.msk [vmem:[#allocation3] sm:$0xff] %vm282, 0.0
        %288 = vst.msk [vmem:[#allocation3 + $0x8] sm:$0xff] %vm282, 0.0
        %289 = vst.msk [vmem:[#allocation3 + $0x10] sm:$0xff] %vm282, 0.0
        %290 = vst.msk [vmem:[#allocation3 + $0x18] sm:$0xff] %vm282, 0.0
        %vm291 = vcmask 64512
        %292 = vst.msk [vmem:[#allocation4] sm:$0xff] %vm291, 0.0
        %293 = vst.msk [vmem:[#allocation4 + $0x8] sm:$0xff] %vm291, 0.0
        %294 = vst.msk [vmem:[#allocation4 + $0x10] sm:$0xff] %vm291, 0.0
        %295 = vst.msk [vmem:[#allocation4 + $0x18] sm:$0xff] %vm291, 0.0
      $region36: #{transformer_block_forward.8} parent=31 // pred_fallthru
        _
      %s296 = smul.u32 %s21, 8
      %s297 = sadd.s32 %s20, 1
      %s298 = smul.u32 %s297, 8
      %p299 = scmp.lt.s32.totalorder %s296, %s298
      // Predicated region
      $region37: #{transformer_block_forward.8} parent=31 // pred_check
        %p300 = pneg %p299
      $region38: #{transformer_block_forward.8} parent=31 // pred_check_branch
        %302 = sbr.rel (%p300) target = $region40
      $region39: #{transformer_block_forward.8} parent=31 // pred_region
        %v303 = vld [vmem:[%s249] sm:$0xff]
        %v304 = vld [vmem:[%s249 + $0x8] sm:$0xff]
        %v305 = vld [vmem:[%s249 + $0x10] sm:$0xff]
        %v306 = vld [vmem:[%s249 + $0x18] sm:$0xff]
        %v307 = vld [vmem:[%s258] sm:$0xff]
        %v308 = vld [vmem:[%s258 + $0x8] sm:$0xff]
        %v309 = vld [vmem:[%s258 + $0x10] sm:$0xff]
        %v310 = vld [vmem:[%s258 + $0x18] sm:$0xff]
        %vm311 = vcmask 64512
        %v313 = vsel %vm311, %v303, 0
        %v316 = vsel %vm311, %v307, 0
        %318 = vmatprep.subr.mxu0 0.0
        %319 = vmatpush1.xpose.msra.mxu0 0.0
        %320 = vmatprep.subr.mxu0 0.0
        %321 = vmatpush1.xpose.msra.mxu0 0.0
        %322 = vmatprep.subr.mxu0 0.0
        %323 = vmatpush1.xpose.msra.mxu0 0.0
        %324 = vmatprep.subr.mxu0 0.0
        %325 = vmatpush1.xpose.msra.mxu0 0.0
        %326 = vmatprep.subr.mxu0 0.0
        %327 = vmatpush1.xpose.msra.mxu0 0.0
        %328 = vmatprep.subr.mxu0 0.0
        %329 = vmatpush1.xpose.msra.mxu0 0.0
        %330 = vmatprep.subr.mxu0 0.0
        %331 = vmatpush1.xpose.msra.mxu0 0.0
        %332 = vmatprep.subr.mxu0 0.0
        %333 = vmatpush1.xpose.msra.mxu0 0.0
        %334 = vmatprep.subr.mxu0 0.0
        %335 = vmatpush1.xpose.msra.mxu0 0.0
        %336 = vmatprep.subr.mxu0 0.0
        %337 = vmatpush1.xpose.msra.mxu0 0.0
        %338 = vmatprep.subr.mxu0 0.0
        %339 = vmatpush1.xpose.msra.mxu0 0.0
        %340 = vmatprep.subr.mxu0 0.0
        %341 = vmatpush1.xpose.msra.mxu0 0.0
        %342 = vmatprep.subr.mxu0 0.0
        %343 = vmatpush1.xpose.msra.mxu0 0.0
        %344 = vmatprep.subr.mxu0 0.0
        %345 = vmatpush1.xpose.msra.mxu0 0.0
        %346 = vmatprep.subr.mxu0 0.0
        %347 = vmatpush1.xpose.msra.mxu0 0.0
        %348 = vmatprep.subr.mxu0 0.0
        %349 = vmatpush1.xpose.msra.mxu0 %v316
        %350 = vmatprep.subr.mxu0 0.0
        %351 = vmatpush2.xpose.msra.mxu0 0.0
        %352 = vmatprep.subr.mxu0 0.0
        %353 = vmatpush2.xpose.msra.mxu0 0.0
        %354 = vmatprep.subr.mxu0 0.0
        %355 = vmatpush2.xpose.msra.mxu0 0.0
        %356 = vmatprep.subr.mxu0 0.0
        %357 = vmatpush2.xpose.msra.mxu0 0.0
        %358 = vmatprep.subr.mxu0 0.0
        %359 = vmatpush2.xpose.msra.mxu0 0.0
        %360 = vmatprep.subr.mxu0 0.0
        %361 = vmatpush2.xpose.msra.mxu0 0.0
        %362 = vmatprep.subr.mxu0 0.0
        %363 = vmatpush2.xpose.msra.mxu0 0.0
        %364 = vmatprep.subr.mxu0 0.0
        %365 = vmatpush2.xpose.msra.mxu0 0.0
        %366 = vmatprep.subr.mxu0 0.0
        %367 = vmatpush2.xpose.msra.mxu0 0.0
        %368 = vmatprep.subr.mxu0 0.0
        %369 = vmatpush2.xpose.msra.mxu0 0.0
        %370 = vmatprep.subr.mxu0 0.0
        %371 = vmatpush2.xpose.msra.mxu0 0.0
        %372 = vmatprep.subr.mxu0 0.0
        %373 = vmatpush2.xpose.msra.mxu0 0.0
        %374 = vmatprep.subr.mxu0 0.0
        %375 = vmatpush2.xpose.msra.mxu0 0.0
        %376 = vmatprep.subr.mxu0 0.0
        %377 = vmatpush2.xpose.msra.mxu0 0.0
        %378 = vmatprep.subr.mxu0 0.0
        %379 = vmatpush2.xpose.msra.mxu0 0.0
        %380 = vmatprep.subr.mxu0 0.0
        %381 = vmatpush2.xpose.msra.mxu0 0.0
        %382 = vmatprep.mubr.f32.mxu0 0.0
        %383 = vmatmul.mubr.f32.gmra.mxu0 %v313
        %v384 = vpop.f32.mrf.mxu0
        %v385 = vadd.f32 0.0, %v384
        %v386 = vpop.f32.mrf.mxu0
        %387 = vdwg.mxu0
        %v389 = vsel %vm311, %v304, 0
        %v392 = vsel %vm311, %v308, 0
        %394 = vmatprep.subr.mxu0 0.0
        %395 = vmatpush1.xpose.msra.mxu0 0.0
        %396 = vmatprep.subr.mxu0 0.0
        %397 = vmatpush1.xpose.msra.mxu0 0.0
        %398 = vmatprep.subr.mxu0 0.0
        %399 = vmatpush1.xpose.msra.mxu0 0.0
        %400 = vmatprep.subr.mxu0 0.0
        %401 = vmatpush1.xpose.msra.mxu0 0.0
        %402 = vmatprep.subr.mxu0 0.0
        %403 = vmatpush1.xpose.msra.mxu0 0.0
        %404 = vmatprep.subr.mxu0 0.0
        %405 = vmatpush1.xpose.msra.mxu0 0.0
        %406 = vmatprep.subr.mxu0 0.0
        %407 = vmatpush1.xpose.msra.mxu0 0.0
        %408 = vmatprep.subr.mxu0 0.0
        %409 = vmatpush1.xpose.msra.mxu0 0.0
        %410 = vmatprep.subr.mxu0 0.0
        %411 = vmatpush1.xpose.msra.mxu0 0.0
        %412 = vmatprep.subr.mxu0 0.0
        %413 = vmatpush1.xpose.msra.mxu0 0.0
        %414 = vmatprep.subr.mxu0 0.0
        %415 = vmatpush1.xpose.msra.mxu0 0.0
        %416 = vmatprep.subr.mxu0 0.0
        %417 = vmatpush1.xpose.msra.mxu0 0.0
        %418 = vmatprep.subr.mxu0 0.0
        %419 = vmatpush1.xpose.msra.mxu0 0.0
        %420 = vmatprep.subr.mxu0 0.0
        %421 = vmatpush1.xpose.msra.mxu0 0.0
        %422 = vmatprep.subr.mxu0 0.0
        %423 = vmatpush1.xpose.msra.mxu0 0.0
        %424 = vmatprep.subr.mxu0 0.0
        %425 = vmatpush1.xpose.msra.mxu0 %v392
        %426 = vmatprep.subr.mxu0 0.0
        %427 = vmatpush2.xpose.msra.mxu0 0.0
        %428 = vmatprep.subr.mxu0 0.0
        %429 = vmatpush2.xpose.msra.mxu0 0.0
        %430 = vmatprep.subr.mxu0 0.0
        %431 = vmatpush2.xpose.msra.mxu0 0.0
        %432 = vmatprep.subr.mxu0 0.0
        %433 = vmatpush2.xpose.msra.mxu0 0.0
        %434 = vmatprep.subr.mxu0 0.0
        %435 = vmatpush2.xpose.msra.mxu0 0.0
        %436 = vmatprep.subr.mxu0 0.0
        %437 = vmatpush2.xpose.msra.mxu0 0.0
        %438 = vmatprep.subr.mxu0 0.0
        %439 = vmatpush2.xpose.msra.mxu0 0.0
        %440 = vmatprep.subr.mxu0 0.0
        %441 = vmatpush2.xpose.msra.mxu0 0.0
        %442 = vmatprep.subr.mxu0 0.0
        %443 = vmatpush2.xpose.msra.mxu0 0.0
        %444 = vmatprep.subr.mxu0 0.0
        %445 = vmatpush2.xpose.msra.mxu0 0.0
        %446 = vmatprep.subr.mxu0 0.0
        %447 = vmatpush2.xpose.msra.mxu0 0.0
        %448 = vmatprep.subr.mxu0 0.0
        %449 = vmatpush2.xpose.msra.mxu0 0.0
        %450 = vmatprep.subr.mxu0 0.0
        %451 = vmatpush2.xpose.msra.mxu0 0.0
        %452 = vmatprep.subr.mxu0 0.0
        %453 = vmatpush2.xpose.msra.mxu0 0.0
        %454 = vmatprep.subr.mxu0 0.0
        %455 = vmatpush2.xpose.msra.mxu0 0.0
        %456 = vmatprep.subr.mxu0 0.0
        %457 = vmatpush2.xpose.msra.mxu0 0.0
        %458 = vmatprep.mubr.f32.mxu0 0.0
        %459 = vmatmul.mubr.f32.gmra.mxu0 %v389
        %v460 = vpop.f32.mrf.mxu0
        %v461 = vadd.f32 0.0, %v460
        %v462 = vpop.f32.mrf.mxu0
        %463 = vdwg.mxu0
        %v465 = vsel %vm311, %v305, 0
        %v468 = vsel %vm311, %v309, 0
        %470 = vmatprep.subr.mxu0 0.0
        %471 = vmatpush1.xpose.msra.mxu0 0.0
        %472 = vmatprep.subr.mxu0 0.0
        %473 = vmatpush1.xpose.msra.mxu0 0.0
        %474 = vmatprep.subr.mxu0 0.0
        %475 = vmatpush1.xpose.msra.mxu0 0.0
        %476 = vmatprep.subr.mxu0 0.0
        %477 = vmatpush1.xpose.msra.mxu0 0.0
        %478 = vmatprep.subr.mxu0 0.0
        %479 = vmatpush1.xpose.msra.mxu0 0.0
        %480 = vmatprep.subr.mxu0 0.0
        %481 = vmatpush1.xpose.msra.mxu0 0.0
        %482 = vmatprep.subr.mxu0 0.0
        %483 = vmatpush1.xpose.msra.mxu0 0.0
        %484 = vmatprep.subr.mxu0 0.0
        %485 = vmatpush1.xpose.msra.mxu0 0.0
        %486 = vmatprep.subr.mxu0 0.0
        %487 = vmatpush1.xpose.msra.mxu0 0.0
        %488 = vmatprep.subr.mxu0 0.0
        %489 = vmatpush1.xpose.msra.mxu0 0.0
        %490 = vmatprep.subr.mxu0 0.0
        %491 = vmatpush1.xpose.msra.mxu0 0.0
        %492 = vmatprep.subr.mxu0 0.0
        %493 = vmatpush1.xpose.msra.mxu0 0.0
        %494 = vmatprep.subr.mxu0 0.0
        %495 = vmatpush1.xpose.msra.mxu0 0.0
        %496 = vmatprep.subr.mxu0 0.0
        %497 = vmatpush1.xpose.msra.mxu0 0.0
        %498 = vmatprep.subr.mxu0 0.0
        %499 = vmatpush1.xpose.msra.mxu0 0.0
        %500 = vmatprep.subr.mxu0 0.0
        %501 = vmatpush1.xpose.msra.mxu0 %v468
        %502 = vmatprep.subr.mxu0 0.0
        %503 = vmatpush2.xpose.msra.mxu0 0.0
        %504 = vmatprep.subr.mxu0 0.0
        %505 = vmatpush2.xpose.msra.mxu0 0.0
        %506 = vmatprep.subr.mxu0 0.0
        %507 = vmatpush2.xpose.msra.mxu0 0.0
        %508 = vmatprep.subr.mxu0 0.0
        %509 = vmatpush2.xpose.msra.mxu0 0.0
        %510 = vmatprep.subr.mxu0 0.0
        %511 = vmatpush2.xpose.msra.mxu0 0.0
        %512 = vmatprep.subr.mxu0 0.0
        %513 = vmatpush2.xpose.msra.mxu0 0.0
        %514 = vmatprep.subr.mxu0 0.0
        %515 = vmatpush2.xpose.msra.mxu0 0.0
        %516 = vmatprep.subr.mxu0 0.0
        %517 = vmatpush2.xpose.msra.mxu0 0.0
        %518 = vmatprep.subr.mxu0 0.0
        %519 = vmatpush2.xpose.msra.mxu0 0.0
        %520 = vmatprep.subr.mxu0 0.0
        %521 = vmatpush2.xpose.msra.mxu0 0.0
        %522 = vmatprep.subr.mxu0 0.0
        %523 = vmatpush2.xpose.msra.mxu0 0.0
        %524 = vmatprep.subr.mxu0 0.0
        %525 = vmatpush2.xpose.msra.mxu0 0.0
        %526 = vmatprep.subr.mxu0 0.0
        %527 = vmatpush2.xpose.msra.mxu0 0.0
        %528 = vmatprep.subr.mxu0 0.0
        %529 = vmatpush2.xpose.msra.mxu0 0.0
        %530 = vmatprep.subr.mxu0 0.0
        %531 = vmatpush2.xpose.msra.mxu0 0.0
        %532 = vmatprep.subr.mxu0 0.0
        %533 = vmatpush2.xpose.msra.mxu0 0.0
        %534 = vmatprep.mubr.f32.mxu0 0.0
        %535 = vmatmul.mubr.f32.gmra.mxu0 %v465
        %v536 = vpop.f32.mrf.mxu0
        %v537 = vadd.f32 0.0, %v536
        %v538 = vpop.f32.mrf.mxu0
        %539 = vdwg.mxu0
        %v541 = vsel %vm311, %v306, 0
        %v544 = vsel %vm311, %v310, 0
        %546 = vmatprep.subr.mxu0 0.0
        %547 = vmatpush1.xpose.msra.mxu0 0.0
        %548 = vmatprep.subr.mxu0 0.0
        %549 = vmatpush1.xpose.msra.mxu0 0.0
        %550 = vmatprep.subr.mxu0 0.0
        %551 = vmatpush1.xpose.msra.mxu0 0.0
        %552 = vmatprep.subr.mxu0 0.0
        %553 = vmatpush1.xpose.msra.mxu0 0.0
        %554 = vmatprep.subr.mxu0 0.0
        %555 = vmatpush1.xpose.msra.mxu0 0.0
        %556 = vmatprep.subr.mxu0 0.0
        %557 = vmatpush1.xpose.msra.mxu0 0.0
        %558 = vmatprep.subr.mxu0 0.0
        %559 = vmatpush1.xpose.msra.mxu0 0.0
        %560 = vmatprep.subr.mxu0 0.0
        %561 = vmatpush1.xpose.msra.mxu0 0.0
        %562 = vmatprep.subr.mxu0 0.0
        %563 = vmatpush1.xpose.msra.mxu0 0.0
        %564 = vmatprep.subr.mxu0 0.0
        %565 = vmatpush1.xpose.msra.mxu0 0.0
        %566 = vmatprep.subr.mxu0 0.0
        %567 = vmatpush1.xpose.msra.mxu0 0.0
        %568 = vmatprep.subr.mxu0 0.0
        %569 = vmatpush1.xpose.msra.mxu0 0.0
        %570 = vmatprep.subr.mxu0 0.0
        %571 = vmatpush1.xpose.msra.mxu0 0.0
        %572 = vmatprep.subr.mxu0 0.0
        %573 = vmatpush1.xpose.msra.mxu0 0.0
        %574 = vmatprep.subr.mxu0 0.0
        %575 = vmatpush1.xpose.msra.mxu0 0.0
        %576 = vmatprep.subr.mxu0 0.0
        %577 = vmatpush1.xpose.msra.mxu0 %v544
        %578 = vmatprep.subr.mxu0 0.0
        %579 = vmatpush2.xpose.msra.mxu0 0.0
        %580 = vmatprep.subr.mxu0 0.0
        %581 = vmatpush2.xpose.msra.mxu0 0.0
        %582 = vmatprep.subr.mxu0 0.0
        %583 = vmatpush2.xpose.msra.mxu0 0.0
        %584 = vmatprep.subr.mxu0 0.0
        %585 = vmatpush2.xpose.msra.mxu0 0.0
        %586 = vmatprep.subr.mxu0 0.0
        %587 = vmatpush2.xpose.msra.mxu0 0.0
        %588 = vmatprep.subr.mxu0 0.0
        %589 = vmatpush2.xpose.msra.mxu0 0.0
        %590 = vmatprep.subr.mxu0 0.0
        %591 = vmatpush2.xpose.msra.mxu0 0.0
        %592 = vmatprep.subr.mxu0 0.0
        %593 = vmatpush2.xpose.msra.mxu0 0.0
        %594 = vmatprep.subr.mxu0 0.0
        %595 = vmatpush2.xpose.msra.mxu0 0.0
        %596 = vmatprep.subr.mxu0 0.0
        %597 = vmatpush2.xpose.msra.mxu0 0.0
        %598 = vmatprep.subr.mxu0 0.0
        %599 = vmatpush2.xpose.msra.mxu0 0.0
        %600 = vmatprep.subr.mxu0 0.0
        %601 = vmatpush2.xpose.msra.mxu0 0.0
        %602 = vmatprep.subr.mxu0 0.0
        %603 = vmatpush2.xpose.msra.mxu0 0.0
        %604 = vmatprep.subr.mxu0 0.0
        %605 = vmatpush2.xpose.msra.mxu0 0.0
        %606 = vmatprep.subr.mxu0 0.0
        %607 = vmatpush2.xpose.msra.mxu0 0.0
        %608 = vmatprep.subr.mxu0 0.0
        %609 = vmatpush2.xpose.msra.mxu0 0.0
        %610 = vmatprep.mubr.f32.mxu0 0.0
        %611 = vmatmul.mubr.f32.gmra.mxu0 %v541
        %v612 = vpop.f32.mrf.mxu0
        %v613 = vadd.f32 0.0, %v612
        %v614 = vpop.f32.mrf.mxu0
        %615 = vdwg.mxu0
        %v616 = vmul.f32 %v385, 0.35355338
        %v617 = vmul.f32 %v461, 0.35355338
        %v618 = vmul.f32 %v537, 0.35355338
        %v619 = vmul.f32 %v613, 0.35355338
        %s620 = smul.u32 %s20, 8
        %v621 = vlaneseq
        %v622 = vshrl.u32 %v621, 7
        %v623 = vstv %s620
        %v624 = vadd.s32 %v623, %v622
        %v625 = vlaneseq
        %v626 = vand.u32 %v625, 127
        %v627 = vstv %s296
        %v628 = vadd.s32 %v627, %v626
        %vm629 = vcmp.gt.s32.totalorder %v628, %v624
        %v630 = vsel %vm629, -1e+30, %v616
        %v631 = vsel %vm629, -1e+30, %v617
        %v632 = vsel %vm629, -1e+30, %v618
        %v633 = vsel %vm629, -1e+30, %v619
        %v634 = vld [vmem:[#allocation2] sm:$0xff]
        %v635 = vld [vmem:[#allocation2 + $0x8] sm:$0xff]
        %v636 = vld [vmem:[#allocation2 + $0x10] sm:$0xff]
        %v637 = vld [vmem:[#allocation2 + $0x18] sm:$0xff]
        %v638 = vsel %vm311, %v630, -inf
        %639 = vmax.xlane.f32.xlu0 %v638
        %v640 = vpop.xlane.xlu0 %639
        %v641 = vsel %vm311, %v631, -inf
        %642 = vmax.xlane.f32.xlu0 %v641
        %v643 = vpop.xlane.xlu0 %642
        %v644 = vsel %vm311, %v632, -inf
        %645 = vmax.xlane.f32.xlu0 %v644
        %v646 = vpop.xlane.xlu0 %645
        %v647 = vsel %vm311, %v633, -inf
        %648 = vmax.xlane.f32.xlu0 %v647
        %v649 = vpop.xlane.xlu0 %648
        %v650 = vmax.f32 %v634, %v640
        %v651 = vmax.f32 %v635, %v643
        %v652 = vmax.f32 %v636, %v646
        %v653 = vmax.f32 %v637, %v649
        %v654 = vsub.f32 %v634, %v650
        %v655 = vsub.f32 %v635, %v651
        %v656 = vsub.f32 %v636, %v652
        %v657 = vsub.f32 %v637, %v653
        %v658 = vmul.f32 %v654, 1.442695
        %v659 = vpow.pop %v658
        %v660 = vmul.f32 %v655, 1.442695
        %v661 = vpow.pop %v660
        %v662 = vmul.f32 %v656, 1.442695
        %v663 = vpow.pop %v662
        %v664 = vmul.f32 %v657, 1.442695
        %v665 = vpow.pop %v664
        %667 = vset.pattern.permute.xlu0 0
        %668 = vperm.xlu0 %667, %v650
        %v669 = vpop.permute.xlu0 %668
        %672 = vset.pattern.permute.xlu0 0
        %673 = vperm.xlu0 %672, %v651
        %v674 = vpop.permute.xlu0 %673
        %677 = vset.pattern.permute.xlu0 0
        %678 = vperm.xlu0 %677, %v652
        %v679 = vpop.permute.xlu0 %678
        %682 = vset.pattern.permute.xlu0 0
        %683 = vperm.xlu0 %682, %v653
        %v684 = vpop.permute.xlu0 %683
        %v686 = vsub.f32 %v630, %v669
        %v687 = vsub.f32 %v631, %v674
        %v688 = vsub.f32 %v632, %v679
        %v689 = vsub.f32 %v633, %v684
        %v690 = vmul.f32 %v686, 1.442695
        %v691 = vpow.pop %v690
        %v692 = vmul.f32 %v687, 1.442695
        %v693 = vpow.pop %v692
        %v694 = vmul.f32 %v688, 1.442695
        %v695 = vpow.pop %v694
        %v696 = vmul.f32 %v689, 1.442695
        %v697 = vpow.pop %v696
        %v698 = vld [vmem:[#allocation3] sm:$0xff]
        %v699 = vld [vmem:[#allocation3 + $0x8] sm:$0xff]
        %v700 = vld [vmem:[#allocation3 + $0x10] sm:$0xff]
        %v701 = vld [vmem:[#allocation3 + $0x18] sm:$0xff]
        %v702 = vmul.f32 %v659, %v698
        %v703 = vmul.f32 %v661, %v699
        %v704 = vmul.f32 %v663, %v700
        %v705 = vmul.f32 %v665, %v701
        %v706 = vsel %vm311, %v691, 0.0
        %707 = vadd.xlane.f32.xlu0 %v706
        %v708 = vpop.xlane.xlu0 %707
        %v709 = vsel %vm311, %v693, 0.0
        %710 = vadd.xlane.f32.xlu0 %v709
        %v711 = vpop.xlane.xlu0 %710
        %v712 = vsel %vm311, %v695, 0.0
        %713 = vadd.xlane.f32.xlu0 %v712
        %v714 = vpop.xlane.xlu0 %713
        %v715 = vsel %vm311, %v697, 0.0
        %716 = vadd.xlane.f32.xlu0 %v715
        %v717 = vpop.xlane.xlu0 %716
        %v718 = vadd.f32 %v702, %v708
        %v719 = vadd.f32 %v703, %v711
        %v720 = vadd.f32 %v704, %v714
        %v721 = vadd.f32 %v705, %v717
        %vm722 = vcmask 7168
        %723 = vst.msk [vmem:[#allocation3] sm:$0xff] %vm722, %v718
        %724 = vst.msk [vmem:[#allocation3 + $0x8] sm:$0xff] %vm722, %v719
        %725 = vst.msk [vmem:[#allocation3 + $0x10] sm:$0xff] %vm722, %v720
        %726 = vst.msk [vmem:[#allocation3 + $0x18] sm:$0xff] %vm722, %v721
        %v727 = vld [vmem:[%s267] sm:$0xff]
        %v728 = vld [vmem:[%s267 + $0x8] sm:$0xff]
        %v729 = vld [vmem:[%s267 + $0x10] sm:$0xff]
        %v730 = vld [vmem:[%s267 + $0x18] sm:$0xff]
        %v732 = vsel %vm311, %v691, 0
        %734 = vmatprep.subr.mxu0 0.0
        %735 = vmatpush1.msra.mxu0 0.0
        %736 = vmatprep.subr.mxu0 0.0
        %737 = vmatpush1.msra.mxu0 0.0
        %738 = vmatprep.subr.mxu0 0.0
        %739 = vmatpush1.msra.mxu0 0.0
        %740 = vmatprep.subr.mxu0 0.0
        %741 = vmatpush1.msra.mxu0 0.0
        %742 = vmatprep.subr.mxu0 0.0
        %743 = vmatpush1.msra.mxu0 0.0
        %744 = vmatprep.subr.mxu0 0.0
        %745 = vmatpush1.msra.mxu0 0.0
        %746 = vmatprep.subr.mxu0 0.0
        %747 = vmatpush1.msra.mxu0 0.0
        %748 = vmatprep.subr.mxu0 0.0
        %749 = vmatpush1.msra.mxu0 0.0
        %750 = vmatprep.subr.mxu0 0.0
        %751 = vmatpush1.msra.mxu0 0.0
        %752 = vmatprep.subr.mxu0 0.0
        %753 = vmatpush1.msra.mxu0 0.0
        %754 = vmatprep.subr.mxu0 0.0
        %755 = vmatpush1.msra.mxu0 0.0
        %756 = vmatprep.subr.mxu0 0.0
        %757 = vmatpush1.msra.mxu0 0.0
        %758 = vmatprep.subr.mxu0 0.0
        %759 = vmatpush1.msra.mxu0 0.0
        %760 = vmatprep.subr.mxu0 0.0
        %761 = vmatpush1.msra.mxu0 0.0
        %762 = vmatprep.subr.mxu0 0.0
        %763 = vmatpush1.msra.mxu0 0.0
        %764 = vmatprep.subr.mxu0 0.0
        %765 = vmatpush1.msra.mxu0 %v727
        %766 = vmatprep.subr.mxu0 0.0
        %767 = vmatpush2.msra.mxu0 0.0
        %768 = vmatprep.subr.mxu0 0.0
        %769 = vmatpush2.msra.mxu0 0.0
        %770 = vmatprep.subr.mxu0 0.0
        %771 = vmatpush2.msra.mxu0 0.0
        %772 = vmatprep.subr.mxu0 0.0
        %773 = vmatpush2.msra.mxu0 0.0
        %774 = vmatprep.subr.mxu0 0.0
        %775 = vmatpush2.msra.mxu0 0.0
        %776 = vmatprep.subr.mxu0 0.0
        %777 = vmatpush2.msra.mxu0 0.0
        %778 = vmatprep.subr.mxu0 0.0
        %779 = vmatpush2.msra.mxu0 0.0
        %780 = vmatprep.subr.mxu0 0.0
        %781 = vmatpush2.msra.mxu0 0.0
        %782 = vmatprep.subr.mxu0 0.0
        %783 = vmatpush2.msra.mxu0 0.0
        %784 = vmatprep.subr.mxu0 0.0
        %785 = vmatpush2.msra.mxu0 0.0
        %786 = vmatprep.subr.mxu0 0.0
        %787 = vmatpush2.msra.mxu0 0.0
        %788 = vmatprep.subr.mxu0 0.0
        %789 = vmatpush2.msra.mxu0 0.0
        %790 = vmatprep.subr.mxu0 0.0
        %791 = vmatpush2.msra.mxu0 0.0
        %792 = vmatprep.subr.mxu0 0.0
        %793 = vmatpush2.msra.mxu0 0.0
        %794 = vmatprep.subr.mxu0 0.0
        %795 = vmatpush2.msra.mxu0 0.0
        %796 = vmatprep.subr.mxu0 0.0
        %797 = vmatpush2.msra.mxu0 0.0
        %798 = vmatprep.mubr.f32.mxu0 0.0
        %799 = vmatmul.mubr.f32.gmra.mxu0 %v732
        %v800 = vpop.f32.mrf.mxu0
        %v801 = vadd.f32 0.0, %v800
        %v802 = vpop.f32.mrf.mxu0
        %803 = vdwg.mxu0
        %v805 = vsel %vm311, %v693, 0
        %807 = vmatprep.subr.mxu0 0.0
        %808 = vmatpush1.msra.mxu0 0.0
        %809 = vmatprep.subr.mxu0 0.0
        %810 = vmatpush1.msra.mxu0 0.0
        %811 = vmatprep.subr.mxu0 0.0
        %812 = vmatpush1.msra.mxu0 0.0
        %813 = vmatprep.subr.mxu0 0.0
        %814 = vmatpush1.msra.mxu0 0.0
        %815 = vmatprep.subr.mxu0 0.0
        %816 = vmatpush1.msra.mxu0 0.0
        %817 = vmatprep.subr.mxu0 0.0
        %818 = vmatpush1.msra.mxu0 0.0
        %819 = vmatprep.subr.mxu0 0.0
        %820 = vmatpush1.msra.mxu0 0.0
        %821 = vmatprep.subr.mxu0 0.0
        %822 = vmatpush1.msra.mxu0 0.0
        %823 = vmatprep.subr.mxu0 0.0
        %824 = vmatpush1.msra.mxu0 0.0
        %825 = vmatprep.subr.mxu0 0.0
        %826 = vmatpush1.msra.mxu0 0.0
        %827 = vmatprep.subr.mxu0 0.0
        %828 = vmatpush1.msra.mxu0 0.0
        %829 = vmatprep.subr.mxu0 0.0
        %830 = vmatpush1.msra.mxu0 0.0
        %831 = vmatprep.subr.mxu0 0.0
        %832 = vmatpush1.msra.mxu0 0.0
        %833 = vmatprep.subr.mxu0 0.0
        %834 = vmatpush1.msra.mxu0 0.0
        %835 = vmatprep.subr.mxu0 0.0
        %836 = vmatpush1.msra.mxu0 0.0
        %837 = vmatprep.subr.mxu0 0.0
        %838 = vmatpush1.msra.mxu0 %v728
        %839 = vmatprep.subr.mxu0 0.0
        %840 = vmatpush2.msra.mxu0 0.0
        %841 = vmatprep.subr.mxu0 0.0
        %842 = vmatpush2.msra.mxu0 0.0
        %843 = vmatprep.subr.mxu0 0.0
        %844 = vmatpush2.msra.mxu0 0.0
        %845 = vmatprep.subr.mxu0 0.0
        %846 = vmatpush2.msra.mxu0 0.0
        %847 = vmatprep.subr.mxu0 0.0
        %848 = vmatpush2.msra.mxu0 0.0
        %849 = vmatprep.subr.mxu0 0.0
        %850 = vmatpush2.msra.mxu0 0.0
        %851 = vmatprep.subr.mxu0 0.0
        %852 = vmatpush2.msra.mxu0 0.0
        %853 = vmatprep.subr.mxu0 0.0
        %854 = vmatpush2.msra.mxu0 0.0
        %855 = vmatprep.subr.mxu0 0.0
        %856 = vmatpush2.msra.mxu0 0.0
        %857 = vmatprep.subr.mxu0 0.0
        %858 = vmatpush2.msra.mxu0 0.0
        %859 = vmatprep.subr.mxu0 0.0
        %860 = vmatpush2.msra.mxu0 0.0
        %861 = vmatprep.subr.mxu0 0.0
        %862 = vmatpush2.msra.mxu0 0.0
        %863 = vmatprep.subr.mxu0 0.0
        %864 = vmatpush2.msra.mxu0 0.0
        %865 = vmatprep.subr.mxu0 0.0
        %866 = vmatpush2.msra.mxu0 0.0
        %867 = vmatprep.subr.mxu0 0.0
        %868 = vmatpush2.msra.mxu0 0.0
        %869 = vmatprep.subr.mxu0 0.0
        %870 = vmatpush2.msra.mxu0 0.0
        %871 = vmatprep.mubr.f32.mxu0 0.0
        %872 = vmatmul.mubr.f32.gmra.mxu0 %v805
        %v873 = vpop.f32.mrf.mxu0
        %v874 = vadd.f32 0.0, %v873
        %v875 = vpop.f32.mrf.mxu0
        %876 = vdwg.mxu0
        %v878 = vsel %vm311, %v695, 0
        %880 = vmatprep.subr.mxu0 0.0
        %881 = vmatpush1.msra.mxu0 0.0
        %882 = vmatprep.subr.mxu0 0.0
        %883 = vmatpush1.msra.mxu0 0.0
        %884 = vmatprep.subr.mxu0 0.0
        %885 = vmatpush1.msra.mxu0 0.0
        %886 = vmatprep.subr.mxu0 0.0
        %887 = vmatpush1.msra.mxu0 0.0
        %888 = vmatprep.subr.mxu0 0.0
        %889 = vmatpush1.msra.mxu0 0.0
        %890 = vmatprep.subr.mxu0 0.0
        %891 = vmatpush1.msra.mxu0 0.0
        %892 = vmatprep.subr.mxu0 0.0
        %893 = vmatpush1.msra.mxu0 0.0
        %894 = vmatprep.subr.mxu0 0.0
        %895 = vmatpush1.msra.mxu0 0.0
        %896 = vmatprep.subr.mxu0 0.0
        %897 = vmatpush1.msra.mxu0 0.0
        %898 = vmatprep.subr.mxu0 0.0
        %899 = vmatpush1.msra.mxu0 0.0
        %900 = vmatprep.subr.mxu0 0.0
        %901 = vmatpush1.msra.mxu0 0.0
        %902 = vmatprep.subr.mxu0 0.0
        %903 = vmatpush1.msra.mxu0 0.0
        %904 = vmatprep.subr.mxu0 0.0
        %905 = vmatpush1.msra.mxu0 0.0
        %906 = vmatprep.subr.mxu0 0.0
        %907 = vmatpush1.msra.mxu0 0.0
        %908 = vmatprep.subr.mxu0 0.0
        %909 = vmatpush1.msra.mxu0 0.0
        %910 = vmatprep.subr.mxu0 0.0
        %911 = vmatpush1.msra.mxu0 %v729
        %912 = vmatprep.subr.mxu0 0.0
        %913 = vmatpush2.msra.mxu0 0.0
        %914 = vmatprep.subr.mxu0 0.0
        %915 = vmatpush2.msra.mxu0 0.0
        %916 = vmatprep.subr.mxu0 0.0
        %917 = vmatpush2.msra.mxu0 0.0
        %918 = vmatprep.subr.mxu0 0.0
        %919 = vmatpush2.msra.mxu0 0.0
        %920 = vmatprep.subr.mxu0 0.0
        %921 = vmatpush2.msra.mxu0 0.0
        %922 = vmatprep.subr.mxu0 0.0
        %923 = vmatpush2.msra.mxu0 0.0
        %924 = vmatprep.subr.mxu0 0.0
        %925 = vmatpush2.msra.mxu0 0.0
        %926 = vmatprep.subr.mxu0 0.0
        %927 = vmatpush2.msra.mxu0 0.0
        %928 = vmatprep.subr.mxu0 0.0
        %929 = vmatpush2.msra.mxu0 0.0
        %930 = vmatprep.subr.mxu0 0.0
        %931 = vmatpush2.msra.mxu0 0.0
        %932 = vmatprep.subr.mxu0 0.0
        %933 = vmatpush2.msra.mxu0 0.0
        %934 = vmatprep.subr.mxu0 0.0
        %935 = vmatpush2.msra.mxu0 0.0
        %936 = vmatprep.subr.mxu0 0.0
        %937 = vmatpush2.msra.mxu0 0.0
        %938 = vmatprep.subr.mxu0 0.0
        %939 = vmatpush2.msra.mxu0 0.0
        %940 = vmatprep.subr.mxu0 0.0
        %941 = vmatpush2.msra.mxu0 0.0
        %942 = vmatprep.subr.mxu0 0.0
        %943 = vmatpush2.msra.mxu0 0.0
        %944 = vmatprep.mubr.f32.mxu0 0.0
        %945 = vmatmul.mubr.f32.gmra.mxu0 %v878
        %v946 = vpop.f32.mrf.mxu0
        %v947 = vadd.f32 0.0, %v946
        %v948 = vpop.f32.mrf.mxu0
        %949 = vdwg.mxu0
        %v951 = vsel %vm311, %v697, 0
        %953 = vmatprep.subr.mxu0 0.0
        %954 = vmatpush1.msra.mxu0 0.0
        %955 = vmatprep.subr.mxu0 0.0
        %956 = vmatpush1.msra.mxu0 0.0
        %957 = vmatprep.subr.mxu0 0.0
        %958 = vmatpush1.msra.mxu0 0.0
        %959 = vmatprep.subr.mxu0 0.0
        %960 = vmatpush1.msra.mxu0 0.0
        %961 = vmatprep.subr.mxu0 0.0
        %962 = vmatpush1.msra.mxu0 0.0
        %963 = vmatprep.subr.mxu0 0.0
        %964 = vmatpush1.msra.mxu0 0.0
        %965 = vmatprep.subr.mxu0 0.0
        %966 = vmatpush1.msra.mxu0 0.0
        %967 = vmatprep.subr.mxu0 0.0
        %968 = vmatpush1.msra.mxu0 0.0
        %969 = vmatprep.subr.mxu0 0.0
        %970 = vmatpush1.msra.mxu0 0.0
        %971 = vmatprep.subr.mxu0 0.0
        %972 = vmatpush1.msra.mxu0 0.0
        %973 = vmatprep.subr.mxu0 0.0
        %974 = vmatpush1.msra.mxu0 0.0
        %975 = vmatprep.subr.mxu0 0.0
        %976 = vmatpush1.msra.mxu0 0.0
        %977 = vmatprep.subr.mxu0 0.0
        %978 = vmatpush1.msra.mxu0 0.0
        %979 = vmatprep.subr.mxu0 0.0
        %980 = vmatpush1.msra.mxu0 0.0
        %981 = vmatprep.subr.mxu0 0.0
        %982 = vmatpush1.msra.mxu0 0.0
        %983 = vmatprep.subr.mxu0 0.0
        %984 = vmatpush1.msra.mxu0 %v730
        %985 = vmatprep.subr.mxu0 0.0
        %986 = vmatpush2.msra.mxu0 0.0
        %987 = vmatprep.subr.mxu0 0.0
        %988 = vmatpush2.msra.mxu0 0.0
        %989 = vmatprep.subr.mxu0 0.0
        %990 = vmatpush2.msra.mxu0 0.0
        %991 = vmatprep.subr.mxu0 0.0
        %992 = vmatpush2.msra.mxu0 0.0
        %993 = vmatprep.subr.mxu0 0.0
        %994 = vmatpush2.msra.mxu0 0.0
        %995 = vmatprep.subr.mxu0 0.0
        %996 = vmatpush2.msra.mxu0 0.0
        %997 = vmatprep.subr.mxu0 0.0
        %998 = vmatpush2.msra.mxu0 0.0
        %999 = vmatprep.subr.mxu0 0.0
        %1000 = vmatpush2.msra.mxu0 0.0
        %1001 = vmatprep.subr.mxu0 0.0
        %1002 = vmatpush2.msra.mxu0 0.0
        %1003 = vmatprep.subr.mxu0 0.0
        %1004 = vmatpush2.msra.mxu0 0.0
        %1005 = vmatprep.subr.mxu0 0.0
        %1006 = vmatpush2.msra.mxu0 0.0
        %1007 = vmatprep.subr.mxu0 0.0
        %1008 = vmatpush2.msra.mxu0 0.0
        %1009 = vmatprep.subr.mxu0 0.0
        %1010 = vmatpush2.msra.mxu0 0.0
        %1011 = vmatprep.subr.mxu0 0.0
        %1012 = vmatpush2.msra.mxu0 0.0
        %1013 = vmatprep.subr.mxu0 0.0
        %1014 = vmatpush2.msra.mxu0 0.0
        %1015 = vmatprep.subr.mxu0 0.0
        %1016 = vmatpush2.msra.mxu0 0.0
        %1017 = vmatprep.mubr.f32.mxu0 0.0
        %1018 = vmatmul.mubr.f32.gmra.mxu0 %v951
        %v1019 = vpop.f32.mrf.mxu0
        %v1020 = vadd.f32 0.0, %v1019
        %v1021 = vpop.f32.mrf.mxu0
        %1022 = vdwg.mxu0
        %v1023 = vld [vmem:[#allocation4] sm:$0xff]
        %v1024 = vld [vmem:[#allocation4 + $0x8] sm:$0xff]
        %v1025 = vld [vmem:[#allocation4 + $0x10] sm:$0xff]
        %v1026 = vld [vmem:[#allocation4 + $0x18] sm:$0xff]
        %1028 = vset.pattern.permute.xlu0 0
        %1029 = vperm.xlu0 %1028, %v659
        %v1030 = vpop.permute.xlu0 %1029
        %1033 = vset.pattern.permute.xlu0 0
        %1034 = vperm.xlu0 %1033, %v661
        %v1035 = vpop.permute.xlu0 %1034
        %1038 = vset.pattern.permute.xlu0 0
        %1039 = vperm.xlu0 %1038, %v663
        %v1040 = vpop.permute.xlu0 %1039
        %1043 = vset.pattern.permute.xlu0 0
        %1044 = vperm.xlu0 %1043, %v665
        %v1045 = vpop.permute.xlu0 %1044
        %v1047 = vmul.f32 %v1030, %v1023
        %v1048 = vmul.f32 %v1035, %v1024
        %v1049 = vmul.f32 %v1040, %v1025
        %v1050 = vmul.f32 %v1045, %v1026
        %v1051 = vadd.f32 %v1047, %v801
        %v1052 = vadd.f32 %v1048, %v874
        %v1053 = vadd.f32 %v1049, %v947
        %v1054 = vadd.f32 %v1050, %v1020
        %1055 = vst.msk [vmem:[#allocation4] sm:$0xff] %vm311, %v1051
        %1056 = vst.msk [vmem:[#allocation4 + $0x8] sm:$0xff] %vm311, %v1052
        %1057 = vst.msk [vmem:[#allocation4 + $0x10] sm:$0xff] %vm311, %v1053
        %1058 = vst.msk [vmem:[#allocation4 + $0x18] sm:$0xff] %vm311, %v1054
        %1059 = vst.msk [vmem:[#allocation2] sm:$0xff] %vm722, %v650
        %1060 = vst.msk [vmem:[#allocation2 + $0x8] sm:$0xff] %vm722, %v651
        %1061 = vst.msk [vmem:[#allocation2 + $0x10] sm:$0xff] %vm722, %v652
        %1062 = vst.msk [vmem:[#allocation2 + $0x18] sm:$0xff] %vm722, %v653
      $region40: #{transformer_block_forward.8} parent=31 // pred_fallthru
        _
      // Predicated region
      $region41: #{transformer_block_forward.8} parent=31 // pred_check
        %p1063 = pneg %p278
      $region42: #{transformer_block_forward.8} parent=31 // pred_check_branch
        %1065 = sbr.rel (%p1063) target = $region44
      $region43: #{transformer_block_forward.8} parent=31 // pred_region
        %v1066 = vld [vmem:[#allocation3] sm:$0xff]
        %v1067 = vld [vmem:[#allocation3 + $0x8] sm:$0xff]
        %v1068 = vld [vmem:[#allocation3 + $0x10] sm:$0xff]
        %v1069 = vld [vmem:[#allocation3 + $0x18] sm:$0xff]
        %v1070 = vrcp.pop %v1066
        %v1071 = vrcp.pop %v1067
        %v1072 = vrcp.pop %v1068
        %v1073 = vrcp.pop %v1069
        %v1074 = vld [vmem:[#allocation4] sm:$0xff]
        %v1075 = vld [vmem:[#allocation4 + $0x8] sm:$0xff]
        %v1076 = vld [vmem:[#allocation4 + $0x10] sm:$0xff]
        %v1077 = vld [vmem:[#allocation4 + $0x18] sm:$0xff]
        %1079 = vset.pattern.permute.xlu0 0
        %1080 = vperm.xlu0 %1079, %v1070
        %v1081 = vpop.permute.xlu0 %1080
        %1084 = vset.pattern.permute.xlu0 0
        %1085 = vperm.xlu0 %1084, %v1071
        %v1086 = vpop.permute.xlu0 %1085
        %1089 = vset.pattern.permute.xlu0 0
        %1090 = vperm.xlu0 %1089, %v1072
        %v1091 = vpop.permute.xlu0 %1090
        %1094 = vset.pattern.permute.xlu0 0
        %1095 = vperm.xlu0 %1094, %v1073
        %v1096 = vpop.permute.xlu0 %1095
        %v1098 = vmul.f32 %v1074, %v1081
        %v1099 = vmul.f32 %v1075, %v1086
        %v1100 = vmul.f32 %v1076, %v1091
        %v1101 = vmul.f32 %v1077, %v1096
        %vm1102 = vcmask 64512
        %1103 = vst.msk [vmem:[%s276] sm:$0xff] %vm1102, %v1098
        %1104 = vst.msk [vmem:[%s276 + $0x8] sm:$0xff] %vm1102, %v1099
        %1105 = vst.msk [vmem:[%s276 + $0x10] sm:$0xff] %vm1102, %v1100
        %1106 = vst.msk [vmem:[%s276 + $0x18] sm:$0xff] %vm1102, %v1101
      $region44: #{transformer_block_forward.8} parent=31 // pred_fallthru
        _
      %s1107 = smul.u32 4, %s19
      %p1108 = scmp.lt.s32.totalorder %s1107, 7
      %s1109 = scalar_select %p1108, %s1107, 7
      %p1110 = scmp.lt.s32.totalorder %s20, 0
      %s1111 = scalar_select %p1110, %s20, 0
      %s1112 = sadd.s32 %s1111, %s1109
      %s1113 = smul.addr %s1112, 8
      %s1114 = scalar_lea.vmem %s3, %s1113
      // Predicated region
      $region45: #{transformer_block_forward.8} parent=31 // pred_check
        %p1115 = pneg %p137
      $region46: #{transformer_block_forward.8} parent=31 // pred_check_branch
        %1117 = sbr.rel (%p1115) target = $region48
      $region47: #{transformer_block_forward.8} parent=31 // pred_region
        %s1118 = smul.u32 4, %s19
      $region48: #{transformer_block_forward.8} parent=31 // pred_fallthru
        _
    $region32: #{transformer_block_forward.8} parent=5 // pred_fallthru
      _
    %p1119 = scmp.le.s32.totalorder 2, %s9
    // Predicated region
    $region49: #{transformer_block_forward.8} parent=5 // pred_check
      %p1120 = pneg %p1119
    $region50: #{transformer_block_forward.8} parent=5 // pred_check_branch
      %1122 = sbr.rel (%p1120) target = $region52
    $region51: #{transformer_block_forward.8} parent=5 // pred_region
      %s1123 = ssub.s32 %s9, 2
      // Predicated region
      $region53: #{transformer_block_forward.8} parent=51 // pred_check
        %p1124 = pneg %p143
      $region54: #{transformer_block_forward.8} parent=51 // pred_check_branch
        %1126 = sbr.rel (%p1124) target = $region56
      $region55: #{transformer_block_forward.8} parent=51 // pred_region
        %s1127 = smul.u32 4, %s22
        %p1128 = scmp.lt.s32.totalorder %s1127, 7
        %s1129 = scalar_select %p1128, %s1127, 7
        %p1130 = scmp.lt.s32.totalorder %s23, 0
        %s1131 = scalar_select %p1130, %s23, 0
        %s1132 = sadd.s32 %s1131, %s1129
        %s1133 = smul.addr %s1132, 8
        %s1134 = scalar_lea.vmem %s3, %s1133
      $region56: #{transformer_block_forward.8} parent=51 // pred_fallthru
        _
    $region52: #{transformer_block_forward.8} parent=5 // pred_fallthru
      _
  $region6: #{transformer_block_forward.8} parent=0 // loop_footer
    %s13 = sadd.s32 1, %s9
  $region7: #{transformer_block_forward.8} parent=0 // loop_footer_branch
    %8 = sbr.rel target = $region3
  $region8: #{transformer_block_forward.8} parent=0 // loop_exit
    _

// kernel: transformer_block_forward.11
$region0: #{transformer_block_forward.11}
  #allocation0 [shape = 'u32[]', space=smem, size = 0x4, offset = 0x4, fixed_abs, tag = 'smem constant byte address 0x4 - core index']
  #allocation1 [shape = 'u32[144,128]{1,0:T(1,128)}', space=vmem, size = 0x12000, scoped, tag = 'internal scratch']
  #allocation2 [shape = 'f32[16,128]{1,0:T(8,128)}', space=vmem, size = 0x2000, scoped, tag = 'scratch operand']
  %s0 = inlined_call_operand.vmem [shape: f32[16,32], index: 0, kind: input, shape index: {}]
  %s1 = inlined_call_operand.vmem [shape: f32[128,32], index: 1, kind: input, shape index: {}]
  %s2 = inlined_call_operand.vmem [shape: f32[1,128], index: 2, kind: input, shape index: {}]
  %s3 = inlined_call_operand.vmem [shape: f32[16,128], index: 3, kind: output, shape index: {}]
  %s4 = sld [smem:[#allocation0]]
  $region30: #{transformer_block_forward.11} parent=0
    _
  %s6 = ssub.s32 1, %s4
  %s7 = scalar_select 0, %s6, %s4
  // Predicated region
  $region2: #{transformer_block_forward.11} parent=0 // pred_check
    _
  $region3: #{transformer_block_forward.11} parent=0 // pred_check_branch
    %9 = sbr.rel (0) target = $region5
  $region4: #{transformer_block_forward.11} parent=0 // pred_region
    _
  $region5: #{transformer_block_forward.11} parent=0 // pred_fallthru
    _
  // Predicated region
  $region6: #{transformer_block_forward.11} parent=0 // pred_check
    _
  $region7: #{transformer_block_forward.11} parent=0 // pred_check_branch
    %11 = sbr.rel (0) target = $region9
  $region8: #{transformer_block_forward.11} parent=0 // pred_region
    _
  $region9: #{transformer_block_forward.11} parent=0 // pred_fallthru
    _
  // Predicated region
  $region10: #{transformer_block_forward.11} parent=0 // pred_check
    _
  $region11: #{transformer_block_forward.11} parent=0 // pred_check_branch
    %13 = sbr.rel (0) target = $region13
  $region12: #{transformer_block_forward.11} parent=0 // pred_region
    _
  $region13: #{transformer_block_forward.11} parent=0 // pred_fallthru
    _
  %p14 = scmp.eq.s32.totalorder 0, 0
  // Predicated region
  $region14: #{transformer_block_forward.11} parent=0 // pred_check
    %p15 = pneg %p14
  $region15: #{transformer_block_forward.11} parent=0 // pred_check_branch
    %17 = sbr.rel (%p15) target = $region17
  $region16: #{transformer_block_forward.11} parent=0 // pred_region
    %18 = vst [vmem:[#allocation2] sm:$0xff] 0.0
    %19 = vst [vmem:[#allocation2 + $0x8] sm:$0xff] 0.0
  $region17: #{transformer_block_forward.11} parent=0 // pred_fallthru
    _
  %v20 = vld [vmem:[#allocation2] sm:$0xff]
  %v21 = vld [vmem:[#allocation2 + $0x8] sm:$0xff]
  %v22 = vld [vmem:[%s0] sm:$0xff]
  %v23 = vld [vmem:[%s0 + $0x8] sm:$0xff]
  %v24 = vld [vmem:[%s1] sm:$0xff]
  %v25 = vld [vmem:[%s1 + $0x8] sm:$0xff]
  %v26 = vld [vmem:[%s1 + $0x10] sm:$0xff]
  %v27 = vld [vmem:[%s1 + $0x18] sm:$0xff]
  %v28 = vld [vmem:[%s1 + $0x20] sm:$0xff]
  %v29 = vld [vmem:[%s1 + $0x28] sm:$0xff]
  %v30 = vld [vmem:[%s1 + $0x30] sm:$0xff]
  %v31 = vld [vmem:[%s1 + $0x38] sm:$0xff]
  %v32 = vld [vmem:[%s1 + $0x40] sm:$0xff]
  %v33 = vld [vmem:[%s1 + $0x48] sm:$0xff]
  %v34 = vld [vmem:[%s1 + $0x50] sm:$0xff]
  %v35 = vld [vmem:[%s1 + $0x58] sm:$0xff]
  %v36 = vld [vmem:[%s1 + $0x60] sm:$0xff]
  %v37 = vld [vmem:[%s1 + $0x68] sm:$0xff]
  %v38 = vld [vmem:[%s1 + $0x70] sm:$0xff]
  %v39 = vld [vmem:[%s1 + $0x78] sm:$0xff]
  %vm40 = vcmask 261120
  %v42 = vsel %vm40, %v22, 0
  %v45 = vsel %vm40, %v23, 0
  %v48 = vsel %vm40, %v24, 0
  %v51 = vsel %vm40, %v25, 0
  %v54 = vsel %vm40, %v26, 0
  %v57 = vsel %vm40, %v27, 0
  %v60 = vsel %vm40, %v28, 0
  %v63 = vsel %vm40, %v29, 0
  %v66 = vsel %vm40, %v30, 0
  %v69 = vsel %vm40, %v31, 0
  %v72 = vsel %vm40, %v32, 0
  %v75 = vsel %vm40, %v33, 0
  %v78 = vsel %vm40, %v34, 0
  %v81 = vsel %vm40, %v35, 0
  %v84 = vsel %vm40, %v36, 0
  %v87 = vsel %vm40, %v37, 0
  %v90 = vsel %vm40, %v38, 0
  %v93 = vsel %vm40, %v39, 0
  %95 = vmatprep.subr.mxu0 0.0
  %96 = vmatpush1.xpose.msra.mxu0 %v93
  %97 = vmatprep.subr.mxu0 0.0
  %98 = vmatpush1.xpose.msra.mxu0 %v90
  %99 = vmatprep.subr.mxu0 0.0
  %100 = vmatpush1.xpose.msra.mxu0 %v87
  %101 = vmatprep.subr.mxu0 0.0
  %102 = vmatpush1.xpose.msra.mxu0 %v84
  %103 = vmatprep.subr.mxu0 0.0
  %104 = vmatpush1.xpose.msra.mxu0 %v81
  %105 = vmatprep.subr.mxu0 0.0
  %106 = vmatpush1.xpose.msra.mxu0 %v78
  %107 = vmatprep.subr.mxu0 0.0
  %108 = vmatpush1.xpose.msra.mxu0 %v75
  %109 = vmatprep.subr.mxu0 0.0
  %110 = vmatpush1.xpose.msra.mxu0 %v72
  %111 = vmatprep.subr.mxu0 0.0
  %112 = vmatpush1.xpose.msra.mxu0 %v69
  %113 = vmatprep.subr.mxu0 0.0
  %114 = vmatpush1.xpose.msra.mxu0 %v66
  %115 = vmatprep.subr.mxu0 0.0
  %116 = vmatpush1.xpose.msra.mxu0 %v63
  %117 = vmatprep.subr.mxu0 0.0
  %118 = vmatpush1.xpose.msra.mxu0 %v60
  %119 = vmatprep.subr.mxu0 0.0
  %120 = vmatpush1.xpose.msra.mxu0 %v57
  %121 = vmatprep.subr.mxu0 0.0
  %122 = vmatpush1.xpose.msra.mxu0 %v54
  %123 = vmatprep.subr.mxu0 0.0
  %124 = vmatpush1.xpose.msra.mxu0 %v51
  %125 = vmatprep.subr.mxu0 0.0
  %126 = vmatpush1.xpose.msra.mxu0 %v48
  %127 = vmatprep.subr.mxu0 0.0
  %128 = vmatpush2.xpose.msra.mxu0 0.0
  %129 = vmatprep.subr.mxu0 0.0
  %130 = vmatpush2.xpose.msra.mxu0 0.0
  %131 = vmatprep.subr.mxu0 0.0
  %132 = vmatpush2.xpose.msra.mxu0 0.0
  %133 = vmatprep.subr.mxu0 0.0
  %134 = vmatpush2.xpose.msra.mxu0 0.0
  %135 = vmatprep.subr.mxu0 0.0
  %136 = vmatpush2.xpose.msra.mxu0 0.0
  %137 = vmatprep.subr.mxu0 0.0
  %138 = vmatpush2.xpose.msra.mxu0 0.0
  %139 = vmatprep.subr.mxu0 0.0
  %140 = vmatpush2.xpose.msra.mxu0 0.0
  %141 = vmatprep.subr.mxu0 0.0
  %142 = vmatpush2.xpose.msra.mxu0 0.0
  %143 = vmatprep.subr.mxu0 0.0
  %144 = vmatpush2.xpose.msra.mxu0 0.0
  %145 = vmatprep.subr.mxu0 0.0
  %146 = vmatpush2.xpose.msra.mxu0 0.0
  %147 = vmatprep.subr.mxu0 0.0
  %148 = vmatpush2.xpose.msra.mxu0 0.0
  %149 = vmatprep.subr.mxu0 0.0
  %150 = vmatpush2.xpose.msra.mxu0 0.0
  %151 = vmatprep.subr.mxu0 0.0
  %152 = vmatpush2.xpose.msra.mxu0 0.0
  %153 = vmatprep.subr.mxu0 0.0
  %154 = vmatpush2.xpose.msra.mxu0 0.0
  %155 = vmatprep.subr.mxu0 0.0
  %156 = vmatpush2.xpose.msra.mxu0 0.0
  %157 = vmatprep.subr.mxu0 0.0
  %158 = vmatpush2.xpose.msra.mxu0 0.0
  %159 = vmatprep.mubr.f32.mxu0 0.0
  %160 = vmatmul.mubr.f32.gmra.mxu0 %v42
  %v161 = vpop.f32.mrf.mxu0
  %v162 = vadd.f32 0.0, %v161
  %v163 = vpop.f32.mrf.mxu0
  %164 = vmatprep.mubr.f32.mxu0 0.0
  %165 = vmatmul.mubr.f32.gmra.mxu0 %v45
  %v166 = vpop.f32.mrf.mxu0
  %v167 = vadd.f32 0.0, %v166
  %v168 = vpop.f32.mrf.mxu0
  %169 = vdwg.mxu0
  %v170 = vadd.f32 %v20, %v162
  %v171 = vadd.f32 %v21, %v167
  %172 = vst [vmem:[#allocation2] sm:$0xff] %v170
  %173 = vst [vmem:[#allocation2 + $0x8] sm:$0xff] %v171
  // Predicated region
  $region18: #{transformer_block_forward.11} parent=0 // pred_check
    %p174 = pneg %p14
  $region19: #{transformer_block_forward.11} parent=0 // pred_check_branch
    %176 = sbr.rel (%p174) target = $region21
  $region20: #{transformer_block_forward.11} parent=0 // pred_region
    %v177 = vld [vmem:[#allocation2] sm:$0xff]
    %v178 = vld [vmem:[#allocation2 + $0x8] sm:$0xff]
    %v179 = vld [vmem:[%s2] sm:$0x1]
    %v181 = vlaneseq
    %v182 = vshrl.u32 %v181, 7
    %v183 = vsub.s32 0, %v182
    %v184 = vrot.slane %v179, %v183
    %v186 = vadd.f32 %v177, %v184
    %v187 = vadd.f32 %v178, %v184
    %v188 = vmax.f32 %v186, 0.0
    %v189 = vmax.f32 %v187, 0.0
    %190 = vst [vmem:[%s3] sm:$0xff] %v188
    %191 = vst [vmem:[%s3 + $0x8] sm:$0xff] %v189
  $region21: #{transformer_block_forward.11} parent=0 // pred_fallthru
    _
  // Predicated region
  $region22: #{transformer_block_forward.11} parent=0 // pred_check
    _
  $region23: #{transformer_block_forward.11} parent=0 // pred_check_branch
    %193 = sbr.rel (0) target = $region25
  $region24: #{transformer_block_forward.11} parent=0 // pred_region
    _
  $region25: #{transformer_block_forward.11} parent=0 // pred_fallthru
    _
  // Predicated region
  $region26: #{transformer_block_forward.11} parent=0 // pred_check
    _
  $region27: #{transformer_block_forward.11} parent=0 // pred_check_branch
    %195 = sbr.rel (0) target = $region29
  $region28: #{transformer_block_forward.11} parent=0 // pred_region
    _
  $region29: #{transformer_block_forward.11} parent=0 // pred_fallthru
    _

// kernel: transformer_block_forward.13
$region0: #{transformer_block_forward.13}
  #allocation0 [shape = 'u32[]', space=smem, size = 0x4, offset = 0x4, fixed_abs, tag = 'smem constant byte address 0x4 - core index']
  #allocation1 [shape = 'u32[144,128]{1,0:T(1,128)}', space=vmem, size = 0x12000, scoped, tag = 'internal scratch']
  %s0 = inlined_call_operand.vmem [shape: f32[16,32], index: 0, kind: input, shape index: {}]
  %s1 = inlined_call_operand.vmem [shape: f32[16,32], index: 1, kind: input, shape index: {}]
  %s2 = inlined_call_operand.vmem [shape: f32[1,32], index: 2, kind: input, shape index: {}]
  %s3 = inlined_call_operand.vmem [shape: f32[1,32], index: 3, kind: input, shape index: {}]
  %s4 = inlined_call_operand.hbm [shape: f32[16,32], index: 4, kind: output, shape index: {}]
  %s5 = sld [smem:[#allocation0]]
  $region26: #{transformer_block_forward.13} parent=0
    _
  %s7 = ssub.s32 1, %s5
  %s8 = scalar_select 0, %s7, %s5
  $region1: #{transformer_block_forward.13} parent=0
    #allocation2 [shape = 'u8[8192]{0}', space=vmem, size = 0x2000, scoped, tag = 'output window, operand 0, single buffered']
    #allocation3 [shape = 's32[1]{0}', space=sflag, size = 0x4, scoped, tag = 'scoped memory for transformer_block_forward.13']
    %9 = vsyncpa [#allocation3], 0
    // Predicated region
    $region2: #{transformer_block_forward.13} parent=1 // pred_check
      _
    $region3: #{transformer_block_forward.13} parent=1 // pred_check_branch
      %11 = sbr.rel (0) target = $region5
    $region4: #{transformer_block_forward.13} parent=1 // pred_region
      _
    $region5: #{transformer_block_forward.13} parent=1 // pred_fallthru
      _
    // Predicated region
    $region6: #{transformer_block_forward.13} parent=1 // pred_check
      _
    $region7: #{transformer_block_forward.13} parent=1 // pred_check_branch
      %13 = sbr.rel (0) target = $region9
    $region8: #{transformer_block_forward.13} parent=1 // pred_region
      _
    $region9: #{transformer_block_forward.13} parent=1 // pred_fallthru
      _
    // Predicated region
    $region10: #{transformer_block_forward.13} parent=1 // pred_check
      _
    $region11: #{transformer_block_forward.13} parent=1 // pred_check_branch
      %15 = sbr.rel (0) target = $region13
    $region12: #{transformer_block_forward.13} parent=1 // pred_region
      _
    $region13: #{transformer_block_forward.13} parent=1 // pred_fallthru
      _
    // Predicated region
    $region14: #{transformer_block_forward.13} parent=1 // pred_check
      _
    $region15: #{transformer_block_forward.13} parent=1 // pred_check_branch
      %17 = sbr.rel (0) target = $region17
    $region16: #{transformer_block_forward.13} parent=1 // pred_region
      _
    $region17: #{transformer_block_forward.13} parent=1 // pred_fallthru
      _
    %v18 = vld [vmem:[%s0] sm:$0xff]
    %v19 = vld [vmem:[%s0 + $0x8] sm:$0xff]
    %v20 = vld [vmem:[%s1] sm:$0xff]
    %v21 = vld [vmem:[%s1 + $0x8] sm:$0xff]
    %v22 = vadd.f32 %v18, %v20
    %v23 = vadd.f32 %v19, %v21
    %vm24 = vcmask 261120
    %v25 = vsel %vm24, %v22, 0.0
    %26 = vadd.xlane.f32.xlu0 %v25
    %v27 = vpop.xlane.xlu0 %26
    %v28 = vsel %vm24, %v23, 0.0
    %29 = vadd.xlane.f32.xlu0 %v28
    %v30 = vpop.xlane.xlu0 %29
    %v31 = vrcp.pop 32.0
    %v32 = vmul.f32 %v27, %v31
    %v33 = vmul.f32 %v30, %v31
    %v34 = vsub.f32 %v22, %v32
    %v35 = vsub.f32 %v23, %v33
    %v36 = vmul.f32 %v34, %v34
    %v37 = vmul.f32 %v35, %v35
    %v38 = vsel %vm24, %v36, 0.0
    %39 = vadd.xlane.f32.xlu0 %v38
    %v40 = vpop.xlane.xlu0 %39
    %v41 = vsel %vm24, %v37, 0.0
    %42 = vadd.xlane.f32.xlu0 %v41
    %v43 = vpop.xlane.xlu0 %42
    %v44 = vmul.f32 %v40, %v31
    %v45 = vmul.f32 %v43, %v31
    %v46 = vadd.f32 %v44, 1e-05
    %v47 = vadd.f32 %v45, 1e-05
    %v48 = vrsqrt.pop %v46
    %v49 = vrsqrt.pop %v47
    %v50 = vmul.f32 %v34, %v48
    %v51 = vmul.f32 %v35, %v49
    %v52 = vld [vmem:[%s2] sm:$0x1]
    %v54 = vlaneseq
    %v55 = vshrl.u32 %v54, 7
    %v56 = vsub.s32 0, %v55
    %v57 = vrot.slane %v52, %v56
    %v59 = vmul.f32 %v50, %v57
    %v60 = vmul.f32 %v51, %v57
    %v61 = vld [vmem:[%s3] sm:$0x1]
    %v63 = vlaneseq
    %v64 = vshrl.u32 %v63, 7
    %v65 = vsub.s32 0, %v64
    %v66 = vrot.slane %v61, %v65
    %v68 = vadd.f32 %v59, %v66
    %v69 = vadd.f32 %v60, %v66
    %70 = vst.msk [vmem:[#allocation2] sm:$0xff] %vm24, %v68
    %71 = vst.msk [vmem:[#allocation2 + $0x8] sm:$0xff] %vm24, %v69
    // Predicated region
    $region18: #{transformer_block_forward.13} parent=1 // pred_check
      _
    $region19: #{transformer_block_forward.13} parent=1 // pred_check_branch
      %73 = sbr.rel (0) target = $region21
    $region20: #{transformer_block_forward.13} parent=1 // pred_region
      %s75 = ssub.s32 256, 256
      %76 = vsyncadd [#allocation3], %s75
      %s77 = sshll.u32 [#allocation2], 4
      %s78 = int_to_ptr.vmem [resolvable:$true] %s77
      %83 = dma.vmem_to_hbm [thread:$0]  %s78, 256, %s4, [#allocation3], 128, 128, 8
    $region21: #{transformer_block_forward.13} parent=1 // pred_fallthru
      _
    // Predicated region
    $region22: #{transformer_block_forward.13} parent=1 // pred_check
      _
    $region23: #{transformer_block_forward.13} parent=1 // pred_check_branch
      %85 = sbr.rel (0) target = $region25
    $region24: #{transformer_block_forward.13} parent=1 // pred_region
      %86 = dma.done [#allocation3], 256
    $region25: #{transformer_block_forward.13} parent=1 // pred_fallthru
      _
    %87 = vsyncpa [#allocation3], 1

// kernel: transformer_block_forward.12
$region0: #{transformer_block_forward.12}
  #allocation0 [shape = 'u32[]', space=smem, size = 0x4, offset = 0x4, fixed_abs, tag = 'smem constant byte address 0x4 - core index']
  #allocation1 [shape = 'u32[144,128]{1,0:T(1,128)}', space=vmem, size = 0x12000, scoped, tag = 'internal scratch']
  #allocation2 [shape = 'f32[16,32]{1,0:T(8,128)}', space=vmem, size = 0x2000, scoped, tag = 'scratch operand']
  %s0 = inlined_call_operand.vmem [shape: f32[16,128], index: 0, kind: input, shape index: {}]
  %s1 = inlined_call_operand.vmem [shape: f32[32,128], index: 1, kind: input, shape index: {}]
  %s2 = inlined_call_operand.vmem [shape: f32[1,32], index: 2, kind: input, shape index: {}]
  %s3 = inlined_call_operand.vmem [shape: f32[16,32], index: 3, kind: output, shape index: {}]
  %s4 = sld [smem:[#allocation0]]
  $region30: #{transformer_block_forward.12} parent=0
    _
  %s6 = ssub.s32 1, %s4
  %s7 = scalar_select 0, %s6, %s4
  // Predicated region
  $region2: #{transformer_block_forward.12} parent=0 // pred_check
    _
  $region3: #{transformer_block_forward.12} parent=0 // pred_check_branch
    %9 = sbr.rel (0) target = $region5
  $region4: #{transformer_block_forward.12} parent=0 // pred_region
    _
  $region5: #{transformer_block_forward.12} parent=0 // pred_fallthru
    _
  // Predicated region
  $region6: #{transformer_block_forward.12} parent=0 // pred_check
    _
  $region7: #{transformer_block_forward.12} parent=0 // pred_check_branch
    %11 = sbr.rel (0) target = $region9
  $region8: #{transformer_block_forward.12} parent=0 // pred_region
    _
  $region9: #{transformer_block_forward.12} parent=0 // pred_fallthru
    _
  // Predicated region
  $region10: #{transformer_block_forward.12} parent=0 // pred_check
    _
  $region11: #{transformer_block_forward.12} parent=0 // pred_check_branch
    %13 = sbr.rel (0) target = $region13
  $region12: #{transformer_block_forward.12} parent=0 // pred_region
    _
  $region13: #{transformer_block_forward.12} parent=0 // pred_fallthru
    _
  %p14 = scmp.eq.s32.totalorder 0, 0
  // Predicated region
  $region14: #{transformer_block_forward.12} parent=0 // pred_check
    %p15 = pneg %p14
  $region15: #{transformer_block_forward.12} parent=0 // pred_check_branch
    %17 = sbr.rel (%p15) target = $region17
  $region16: #{transformer_block_forward.12} parent=0 // pred_region
    %vm18 = vcmask 261120
    %19 = vst.msk [vmem:[#allocation2] sm:$0xff] %vm18, 0.0
    %20 = vst.msk [vmem:[#allocation2 + $0x8] sm:$0xff] %vm18, 0.0
  $region17: #{transformer_block_forward.12} parent=0 // pred_fallthru
    _
  %v21 = vld [vmem:[#allocation2] sm:$0xff]
  %v22 = vld [vmem:[#allocation2 + $0x8] sm:$0xff]
  %v23 = vld [vmem:[%s0] sm:$0xff]
  %v24 = vld [vmem:[%s0 + $0x8] sm:$0xff]
  %v25 = vld [vmem:[%s1] sm:$0xff]
  %v26 = vld [vmem:[%s1 + $0x8] sm:$0xff]
  %v27 = vld [vmem:[%s1 + $0x10] sm:$0xff]
  %v28 = vld [vmem:[%s1 + $0x18] sm:$0xff]
  %29 = vmatprep.subr.mxu0 0.0
  %30 = vmatpush1.xpose.msra.mxu0 0.0
  %31 = vmatprep.subr.mxu0 0.0
  %32 = vmatpush1.xpose.msra.mxu0 0.0
  %33 = vmatprep.subr.mxu0 0.0
  %34 = vmatpush1.xpose.msra.mxu0 0.0
  %35 = vmatprep.subr.mxu0 0.0
  %36 = vmatpush1.xpose.msra.mxu0 0.0
  %37 = vmatprep.subr.mxu0 0.0
  %38 = vmatpush1.xpose.msra.mxu0 0.0
  %39 = vmatprep.subr.mxu0 0.0
  %40 = vmatpush1.xpose.msra.mxu0 0.0
  %41 = vmatprep.subr.mxu0 0.0
  %42 = vmatpush1.xpose.msra.mxu0 0.0
  %43 = vmatprep.subr.mxu0 0.0
  %44 = vmatpush1.xpose.msra.mxu0 0.0
  %45 = vmatprep.subr.mxu0 0.0
  %46 = vmatpush1.xpose.msra.mxu0 0.0
  %47 = vmatprep.subr.mxu0 0.0
  %48 = vmatpush1.xpose.msra.mxu0 0.0
  %49 = vmatprep.subr.mxu0 0.0
  %50 = vmatpush1.xpose.msra.mxu0 0.0
  %51 = vmatprep.subr.mxu0 0.0
  %52 = vmatpush1.xpose.msra.mxu0 0.0
  %53 = vmatprep.subr.mxu0 0.0
  %54 = vmatpush1.xpose.msra.mxu0 %v28
  %55 = vmatprep.subr.mxu0 0.0
  %56 = vmatpush1.xpose.msra.mxu0 %v27
  %57 = vmatprep.subr.mxu0 0.0
  %58 = vmatpush1.xpose.msra.mxu0 %v26
  %59 = vmatprep.subr.mxu0 0.0
  %60 = vmatpush1.xpose.msra.mxu0 %v25
  %61 = vmatprep.subr.mxu0 0.0
  %62 = vmatpush2.xpose.msra.mxu0 0.0
  %63 = vmatprep.subr.mxu0 0.0
  %64 = vmatpush2.xpose.msra.mxu0 0.0
  %65 = vmatprep.subr.mxu0 0.0
  %66 = vmatpush2.xpose.msra.mxu0 0.0
  %67 = vmatprep.subr.mxu0 0.0
  %68 = vmatpush2.xpose.msra.mxu0 0.0
  %69 = vmatprep.subr.mxu0 0.0
  %70 = vmatpush2.xpose.msra.mxu0 0.0
  %71 = vmatprep.subr.mxu0 0.0
  %72 = vmatpush2.xpose.msra.mxu0 0.0
  %73 = vmatprep.subr.mxu0 0.0
  %74 = vmatpush2.xpose.msra.mxu0 0.0
  %75 = vmatprep.subr.mxu0 0.0
  %76 = vmatpush2.xpose.msra.mxu0 0.0
  %77 = vmatprep.subr.mxu0 0.0
  %78 = vmatpush2.xpose.msra.mxu0 0.0
  %79 = vmatprep.subr.mxu0 0.0
  %80 = vmatpush2.xpose.msra.mxu0 0.0
  %81 = vmatprep.subr.mxu0 0.0
  %82 = vmatpush2.xpose.msra.mxu0 0.0
  %83 = vmatprep.subr.mxu0 0.0
  %84 = vmatpush2.xpose.msra.mxu0 0.0
  %85 = vmatprep.subr.mxu0 0.0
  %86 = vmatpush2.xpose.msra.mxu0 0.0
  %87 = vmatprep.subr.mxu0 0.0
  %88 = vmatpush2.xpose.msra.mxu0 0.0
  %89 = vmatprep.subr.mxu0 0.0
  %90 = vmatpush2.xpose.msra.mxu0 0.0
  %91 = vmatprep.subr.mxu0 0.0
  %92 = vmatpush2.xpose.msra.mxu0 0.0
  %93 = vmatprep.mubr.f32.mxu0 0.0
  %94 = vmatmul.mubr.f32.gmra.mxu0 %v23
  %v95 = vpop.f32.mrf.mxu0
  %v96 = vadd.f32 0.0, %v95
  %v97 = vpop.f32.mrf.mxu0
  %98 = vmatprep.mubr.f32.mxu0 0.0
  %99 = vmatmul.mubr.f32.gmra.mxu0 %v24
  %v100 = vpop.f32.mrf.mxu0
  %v101 = vadd.f32 0.0, %v100
  %v102 = vpop.f32.mrf.mxu0
  %103 = vdwg.mxu0
  %v104 = vadd.f32 %v21, %v96
  %v105 = vadd.f32 %v22, %v101
  %vm106 = vcmask 261120
  %107 = vst.msk [vmem:[#allocation2] sm:$0xff] %vm106, %v104
  %108 = vst.msk [vmem:[#allocation2 + $0x8] sm:$0xff] %vm106, %v105
  // Predicated region
  $region18: #{transformer_block_forward.12} parent=0 // pred_check
    %p109 = pneg %p14
  $region19: #{transformer_block_forward.12} parent=0 // pred_check_branch
    %111 = sbr.rel (%p109) target = $region21
  $region20: #{transformer_block_forward.12} parent=0 // pred_region
    %v112 = vld [vmem:[#allocation2] sm:$0xff]
    %v113 = vld [vmem:[#allocation2 + $0x8] sm:$0xff]
    %v114 = vld [vmem:[%s2] sm:$0x1]
    %v116 = vlaneseq
    %v117 = vshrl.u32 %v116, 7
    %v118 = vsub.s32 0, %v117
    %v119 = vrot.slane %v114, %v118
    %v121 = vadd.f32 %v112, %v119
    %v122 = vadd.f32 %v113, %v119
    %123 = vst.msk [vmem:[%s3] sm:$0xff] %vm106, %v121
    %124 = vst.msk [vmem:[%s3 + $0x8] sm:$0xff] %vm106, %v122
  $region21: #{transformer_block_forward.12} parent=0 // pred_fallthru
    _
  // Predicated region
  $region22: #{transformer_block_forward.12} parent=0 // pred_check
    _
  $region23: #{transformer_block_forward.12} parent=0 // pred_check_branch
    %126 = sbr.rel (0) target = $region25
  $region24: #{transformer_block_forward.12} parent=0 // pred_region
    _
  $region25: #{transformer_block_forward.12} parent=0 // pred_fallthru
    _
  // Predicated region
  $region26: #{transformer_block_forward.12} parent=0 // pred_check
    _
  $region27: #{transformer_block_forward.12} parent=0 // pred_check_branch
    %128 = sbr.rel (0) target = $region29
  $region28: #{transformer_block_forward.12} parent=0 // pred_region
    _
  $region29: #{transformer_block_forward.12} parent=0 // pred_fallthru
    _

</llo_original>
